<compile_context>
chip_gen: v5e
topology: v5e:2x2
jax: 0.10.0
libtpu: 0.0.40
codegen_flags: <defaults>
</compile_context>

<pallas_src>
import jax
import jax.numpy as jnp
from jax.experimental import pallas as pl
from jax.experimental.pallas import tpu as pltpu

LAYERS = [2, 20, 20, 20, 20, 20, 20, 20, 20, 1]
DEPTH = len(LAYERS) - 1          # 9 linear layers
HID = max(LAYERS)                # 20 — padded feature width for stacked params


def _dnn_kernel(x_ref, w_ref, b_ref, o_ref):
    # x_ref: (2, tile_n)        — batch on lanes, input features on sublanes (f32)
    # w_ref: (DEPTH, HID, HID)  — stacked weights (f32 or bf16); layer i is
    #                             (out_i, in_i) zero-padded, EXCEPT the last
    #                             layer which is stored transposed (in, out).
    # b_ref: (DEPTH, HID, 1)    — stacked biases, zero-padded (f32)
    # o_ref: (1, tile_n)
    x = x_ref[...]                                   # (2, Tn), f32

    # Layer 0: in_features = 2 → two VPU multiply-adds (skip the MXU entirely).
    w0 = w_ref[0]                                    # (HID, HID); data in [:, :2]
    b0 = b_ref[0]                                    # (HID, 1)
    h = w0[:, 0:1] * x[0:1, :] + w0[:, 1:2] * x[1:2, :] + b0   # promotes to f32
    h = jnp.tanh(h)                                  # (HID, Tn), f32

    # Hidden layers 1 .. DEPTH-2: (HID,HID) @ (HID,Tn) on the MXU.
    # Operands are cast to the weight dtype (bf16 path avoids f32 MXU
    # emulation passes); accumulation stays f32; bias add + tanh stay f32.
    for i in range(1, DEPTH - 1):
        h = jnp.dot(w_ref[i], h.astype(w_ref.dtype),
                    preferred_element_type=jnp.float32) + b_ref[i]
        h = jnp.tanh(h)                              # EUP

    # Output layer: out_features = 1 → VPU multiply + XLU sublane reduction
    # instead of an almost-empty M=1 MXU pass.  Last weight packed transposed:
    # its data lives in w_ref[DEPTH-1][:, 0:1] with shape (HID, 1).
    w_last = w_ref[DEPTH - 1][:, 0:1]                # (HID, 1)
    b_last = b_ref[DEPTH - 1][0:1, :]                # (1, 1)
    out = jnp.sum(w_last * h, axis=0, keepdims=True) + b_last   # (1, Tn), f32
    o_ref[...] = out.astype(o_ref.dtype)


def pack_params(weights, biases, *, mxu_dtype=jnp.float32):
    """Pack per-layer params once (hoisted out of the forward pass).

    weights[i]: (out_i, in_i)  (PyTorch nn.Linear convention)
    biases[i]:  (out_i,)
    Returns (w_stack (DEPTH,HID,HID) in mxu_dtype, b_stack (DEPTH,HID,1) f32).
    The LAST layer's weight is stored transposed (in, out) for the in-kernel
    XLU reduction.
    """
    ws = []
    for i, w in enumerate(weights):
        w = jnp.asarray(w, jnp.float32)
        if i == DEPTH - 1:
            w = w.T                                   # (in, 1)
        ws.append(jnp.pad(w, ((0, HID - w.shape[0]), (0, HID - w.shape[1]))))
    w_stack = jnp.stack(ws).astype(mxu_dtype)         # (DEPTH, HID, HID)
    b_stack = jnp.stack([
        jnp.pad(jnp.asarray(b, jnp.float32), (0, HID - b.shape[0]))[:, None]
        for b in biases
    ])                                                # (DEPTH, HID, 1), f32
    return w_stack, b_stack


def dnn_forward(x, w_stack, b_stack, *, tile_n=1024):
    """x: (N, 2) float32. w_stack/b_stack from pack_params.

    Returns (N, 1) float32, matching the PyTorch DNN forward pass (exactly
    for f32-packed weights; to ~bf16 precision for bf16-packed weights).
    """
    n, f_in = x.shape
    assert f_in == LAYERS[0]

    # Transposed, lane-dense layout: batch on the lane axis; pad to tile_n.
    n_pad = pl.cdiv(n, tile_n) * tile_n
    x_t = jnp.zeros((f_in, n_pad), jnp.float32).at[:, :n].set(x.T)

    grid = (n_pad // tile_n,)

    # Advisory cost estimate for XLA's scheduler (per padded batch row:
    # 2*sum(in*out) flops, (DEPTH-1)*20 tanh evaluations).
    flops_per_row = 2 * sum(LAYERS[i] * LAYERS[i + 1] for i in range(DEPTH))
    param_bytes = (int(w_stack.size) * int(w_stack.dtype.itemsize)
                   + int(b_stack.size) * 4)
    cost = pl.CostEstimate(
        flops=int(flops_per_row * n_pad),
        transcendentals=int((DEPTH - 1) * HID * n_pad),
        bytes_accessed=int((f_in + 1) * n_pad * 4 + param_bytes),
    )

    out = pl.pallas_call(
        _dnn_kernel,
        out_shape=jax.ShapeDtypeStruct((1, n_pad), jnp.float32),
        grid_spec=pltpu.PrefetchScalarGridSpec(
            num_scalar_prefetch=0,
            grid=grid,
            in_specs=[
                pl.BlockSpec((f_in, tile_n), lambda i: (0, i)),        # x (lane-dense)
                # Constant index_maps -> param blocks stay resident in VMEM
                # across grid steps (no per-step re-DMA).
                pl.BlockSpec((DEPTH, HID, HID), lambda i: (0, 0, 0)),  # weights
                pl.BlockSpec((DEPTH, HID, 1), lambda i: (0, 0, 0)),    # biases
            ],
            out_specs=pl.BlockSpec((1, tile_n), lambda i: (0, i)),     # lane-dense out
        ),
        compiler_params=pltpu.CompilerParams(
            dimension_semantics=("parallel",),        # megacore sharding on v7x
        ),
        cost_estimate=cost,
    )(x_t, w_stack, b_stack)

    return out[0, :n][:, None]                        # (N, 1)


def init_params(key):
    """PyTorch nn.Linear-style init: W (out,in), b (out,), U(-1/sqrt(in), 1/sqrt(in))."""
    weights, biases = [], []
    for k in range(DEPTH):
        fan_in, fan_out = LAYERS[k], LAYERS[k + 1]
        key, kw, kb = jax.random.split(key, 3)
        bound = 1.0 / jnp.sqrt(fan_in)
        w = jax.random.uniform(kw, (fan_out, fan_in), jnp.float32, -bound, bound)
        b = jax.random.uniform(kb, (fan_out,), jnp.float32, -bound, bound)
        weights.append(w)
        biases.append(b)
    return weights, biases


def dnn_reference(x, weights, biases):
    h = x
    for i in range(DEPTH):
        h = h @ weights[i].T + biases[i]
        if i < DEPTH - 1:
            h = jnp.tanh(h)
    return h


if __name__ == "__main__":
    key = jax.random.PRNGKey(0)
    key, kx = jax.random.split(key)

    # Non-multiple-of-tile batch; tile_n=1024 -> n_pad=2048, grid=(2,)
    # (>= 2 steps so both v7x TensorCores get work).
    N = 2000
    x = jax.random.uniform(kx, (N, LAYERS[0]), jnp.float32, -1.0, 1.0)

    weights, biases = init_params(key)
    ref = dnn_reference(x, weights, biases)

    # 1) Exact f32 path (matches the PyTorch module numerics).
    w32, b32 = pack_params(weights, biases, mxu_dtype=jnp.float32)
    out_f32 = jax.block_until_ready(dnn_forward(x, w32, b32, tile_n=1024))
    assert out_f32.shape == (N, 1)
    assert jnp.allclose(out_f32, ref, atol=1e-5, rtol=1e-5), "f32 mismatch vs reference"

    # 2) Fast path: bf16 MXU operands, f32 accumulation (looser tolerance).
    #    TODO(synk): adopt bf16 only after validating end-to-end PINN loss /
    #    PDE-residual behaviour, not just the forward allclose.
    wbf, bbf = pack_params(weights, biases, mxu_dtype=jnp.bfloat16)
    out_bf16 = jax.block_until_ready(dnn_forward(x, wbf, bbf, tile_n=1024))
    assert out_bf16.shape == (N, 1)
    assert jnp.allclose(out_bf16, ref, atol=5e-2, rtol=5e-2), "bf16 mismatch vs reference"

    print("KERNEL_OK")
</pallas_src>

<mosaic_0001>
module attributes {stable_mosaic.version = 11 : i64} {
  func.func @_dnn_kernel(%arg0: i32, %arg1: memref<2x1024xf32, #tpu.memory_space<vmem>>, %arg2: memref<9x20x20xf32, #tpu.memory_space<vmem>>, %arg3: memref<9x20x1xf32, #tpu.memory_space<vmem>>, %arg4: memref<1x1024xf32, #tpu.memory_space<vmem>>) attributes {dimension_semantics = [#tpu.dimension_semantics<parallel>], iteration_bounds = array<i64: 2>, scalar_prefetch = 0 : i64, scratch_operands = 0 : i64, tpu.core_type = #tpu.core_type<tc>, window_params = [{transform_indices = @transform_0, window_bounds = array<i64: 2, 1024>}, {pipeline_mode = #tpu.pipeline_mode<synchronous>, transform_indices = @transform_1, window_bounds = array<i64: 9, 20, 20>}, {pipeline_mode = #tpu.pipeline_mode<synchronous>, transform_indices = @transform_2, window_bounds = array<i64: 9, 20, 1>}, {transform_indices = @transform_3, window_bounds = array<i64: 1, 1024>}]} {
    %c0 = arith.constant 0 : index
    %c0_0 = arith.constant 0 : index
    %0 = vector.load %arg1[%c0, %c0_0] : memref<2x1024xf32, #tpu.memory_space<vmem>>, vector<2x1024xf32>
    %c0_1 = arith.constant 0 : index
    %c0_2 = arith.constant 0 : index
    %c0_3 = arith.constant 0 : index
    %1 = vector.load %arg2[%c0_1, %c0_2, %c0_3] : memref<9x20x20xf32, #tpu.memory_space<vmem>>, vector<1x20x20xf32>
    %2 = vector.shape_cast %1 : vector<1x20x20xf32> to vector<20x20xf32>
    %c0_4 = arith.constant 0 : index
    %c0_5 = arith.constant 0 : index
    %c0_6 = arith.constant 0 : index
    %3 = vector.load %arg3[%c0_4, %c0_5, %c0_6] : memref<9x20x1xf32, #tpu.memory_space<vmem>>, vector<1x20x1xf32>
    %4 = vector.shape_cast %3 : vector<1x20x1xf32> to vector<20x1xf32>
    %5 = vector.extract_strided_slice %2 {offsets = [0, 0], sizes = [20, 1], strides = [1, 1]} : vector<20x20xf32> to vector<20x1xf32>
    %6 = vector.extract_strided_slice %0 {offsets = [0, 0], sizes = [1, 1024], strides = [1, 1]} : vector<2x1024xf32> to vector<1x1024xf32>
    %7 = vector.broadcast %5 : vector<20x1xf32> to vector<20x1024xf32>
    %8 = vector.broadcast %6 : vector<1x1024xf32> to vector<20x1024xf32>
    %9 = arith.mulf %7, %8 : vector<20x1024xf32>
    %10 = vector.extract_strided_slice %2 {offsets = [0, 1], sizes = [20, 1], strides = [1, 1]} : vector<20x20xf32> to vector<20x1xf32>
    %11 = vector.extract_strided_slice %0 {offsets = [1, 0], sizes = [1, 1024], strides = [1, 1]} : vector<2x1024xf32> to vector<1x1024xf32>
    %12 = vector.broadcast %10 : vector<20x1xf32> to vector<20x1024xf32>
    %13 = vector.broadcast %11 : vector<1x1024xf32> to vector<20x1024xf32>
    %14 = arith.mulf %12, %13 : vector<20x1024xf32>
    %15 = arith.addf %9, %14 : vector<20x1024xf32>
    %16 = vector.broadcast %4 : vector<20x1xf32> to vector<20x1024xf32>
    %17 = arith.addf %15, %16 : vector<20x1024xf32>
    %18 = math.tanh %17 : vector<20x1024xf32>
    %c1 = arith.constant 1 : index
    %c0_7 = arith.constant 0 : index
    %c0_8 = arith.constant 0 : index
    %19 = vector.load %arg2[%c1, %c0_7, %c0_8] : memref<9x20x20xf32, #tpu.memory_space<vmem>>, vector<1x20x20xf32>
    %20 = vector.shape_cast %19 : vector<1x20x20xf32> to vector<20x20xf32>
    %cst = arith.constant dense<0.000000e+00> : vector<20x1024xf32>
    %21 = tpu.matmul %20, %18, %cst {dimension_numbers = #tpu.dot_dimension_numbers<[1], [0], [0], [1], [0, 0, 1, 1], [], []>} : vector<20x20xf32>, vector<20x1024xf32>, vector<20x1024xf32> -> vector<20x1024xf32>
    %c1_9 = arith.constant 1 : index
    %c0_10 = arith.constant 0 : index
    %c0_11 = arith.constant 0 : index
    %22 = vector.load %arg3[%c1_9, %c0_10, %c0_11] : memref<9x20x1xf32, #tpu.memory_space<vmem>>, vector<1x20x1xf32>
    %23 = vector.shape_cast %22 : vector<1x20x1xf32> to vector<20x1xf32>
    %24 = vector.broadcast %23 : vector<20x1xf32> to vector<20x1024xf32>
    %25 = arith.addf %21, %24 : vector<20x1024xf32>
    %26 = math.tanh %25 : vector<20x1024xf32>
    %c2 = arith.constant 2 : index
    %c0_12 = arith.constant 0 : index
    %c0_13 = arith.constant 0 : index
    %27 = vector.load %arg2[%c2, %c0_12, %c0_13] : memref<9x20x20xf32, #tpu.memory_space<vmem>>, vector<1x20x20xf32>
    %28 = vector.shape_cast %27 : vector<1x20x20xf32> to vector<20x20xf32>
    %cst_14 = arith.constant dense<0.000000e+00> : vector<20x1024xf32>
    %29 = tpu.matmul %28, %26, %cst_14 {dimension_numbers = #tpu.dot_dimension_numbers<[1], [0], [0], [1], [0, 0, 1, 1], [], []>} : vector<20x20xf32>, vector<20x1024xf32>, vector<20x1024xf32> -> vector<20x1024xf32>
    %c2_15 = arith.constant 2 : index
    %c0_16 = arith.constant 0 : index
    %c0_17 = arith.constant 0 : index
    %30 = vector.load %arg3[%c2_15, %c0_16, %c0_17] : memref<9x20x1xf32, #tpu.memory_space<vmem>>, vector<1x20x1xf32>
    %31 = vector.shape_cast %30 : vector<1x20x1xf32> to vector<20x1xf32>
    %32 = vector.broadcast %31 : vector<20x1xf32> to vector<20x1024xf32>
    %33 = arith.addf %29, %32 : vector<20x1024xf32>
    %34 = math.tanh %33 : vector<20x1024xf32>
    %c3 = arith.constant 3 : index
    %c0_18 = arith.constant 0 : index
    %c0_19 = arith.constant 0 : index
    %35 = vector.load %arg2[%c3, %c0_18, %c0_19] : memref<9x20x20xf32, #tpu.memory_space<vmem>>, vector<1x20x20xf32>
    %36 = vector.shape_cast %35 : vector<1x20x20xf32> to vector<20x20xf32>
    %cst_20 = arith.constant dense<0.000000e+00> : vector<20x1024xf32>
    %37 = tpu.matmul %36, %34, %cst_20 {dimension_numbers = #tpu.dot_dimension_numbers<[1], [0], [0], [1], [0, 0, 1, 1], [], []>} : vector<20x20xf32>, vector<20x1024xf32>, vector<20x1024xf32> -> vector<20x1024xf32>
    %c3_21 = arith.constant 3 : index
    %c0_22 = arith.constant 0 : index
    %c0_23 = arith.constant 0 : index
    %38 = vector.load %arg3[%c3_21, %c0_22, %c0_23] : memref<9x20x1xf32, #tpu.memory_space<vmem>>, vector<1x20x1xf32>
    %39 = vector.shape_cast %38 : vector<1x20x1xf32> to vector<20x1xf32>
    %40 = vector.broadcast %39 : vector<20x1xf32> to vector<20x1024xf32>
    %41 = arith.addf %37, %40 : vector<20x1024xf32>
    %42 = math.tanh %41 : vector<20x1024xf32>
    %c4 = arith.constant 4 : index
    %c0_24 = arith.constant 0 : index
    %c0_25 = arith.constant 0 : index
    %43 = vector.load %arg2[%c4, %c0_24, %c0_25] : memref<9x20x20xf32, #tpu.memory_space<vmem>>, vector<1x20x20xf32>
    %44 = vector.shape_cast %43 : vector<1x20x20xf32> to vector<20x20xf32>
    %cst_26 = arith.constant dense<0.000000e+00> : vector<20x1024xf32>
    %45 = tpu.matmul %44, %42, %cst_26 {dimension_numbers = #tpu.dot_dimension_numbers<[1], [0], [0], [1], [0, 0, 1, 1], [], []>} : vector<20x20xf32>, vector<20x1024xf32>, vector<20x1024xf32> -> vector<20x1024xf32>
    %c4_27 = arith.constant 4 : index
    %c0_28 = arith.constant 0 : index
    %c0_29 = arith.constant 0 : index
    %46 = vector.load %arg3[%c4_27, %c0_28, %c0_29] : memref<9x20x1xf32, #tpu.memory_space<vmem>>, vector<1x20x1xf32>
    %47 = vector.shape_cast %46 : vector<1x20x1xf32> to vector<20x1xf32>
    %48 = vector.broadcast %47 : vector<20x1xf32> to vector<20x1024xf32>
    %49 = arith.addf %45, %48 : vector<20x1024xf32>
    %50 = math.tanh %49 : vector<20x1024xf32>
    %c5 = arith.constant 5 : index
    %c0_30 = arith.constant 0 : index
    %c0_31 = arith.constant 0 : index
    %51 = vector.load %arg2[%c5, %c0_30, %c0_31] : memref<9x20x20xf32, #tpu.memory_space<vmem>>, vector<1x20x20xf32>
    %52 = vector.shape_cast %51 : vector<1x20x20xf32> to vector<20x20xf32>
    %cst_32 = arith.constant dense<0.000000e+00> : vector<20x1024xf32>
    %53 = tpu.matmul %52, %50, %cst_32 {dimension_numbers = #tpu.dot_dimension_numbers<[1], [0], [0], [1], [0, 0, 1, 1], [], []>} : vector<20x20xf32>, vector<20x1024xf32>, vector<20x1024xf32> -> vector<20x1024xf32>
    %c5_33 = arith.constant 5 : index
    %c0_34 = arith.constant 0 : index
    %c0_35 = arith.constant 0 : index
    %54 = vector.load %arg3[%c5_33, %c0_34, %c0_35] : memref<9x20x1xf32, #tpu.memory_space<vmem>>, vector<1x20x1xf32>
    %55 = vector.shape_cast %54 : vector<1x20x1xf32> to vector<20x1xf32>
    %56 = vector.broadcast %55 : vector<20x1xf32> to vector<20x1024xf32>
    %57 = arith.addf %53, %56 : vector<20x1024xf32>
    %58 = math.tanh %57 : vector<20x1024xf32>
    %c6 = arith.constant 6 : index
    %c0_36 = arith.constant 0 : index
    %c0_37 = arith.constant 0 : index
    %59 = vector.load %arg2[%c6, %c0_36, %c0_37] : memref<9x20x20xf32, #tpu.memory_space<vmem>>, vector<1x20x20xf32>
    %60 = vector.shape_cast %59 : vector<1x20x20xf32> to vector<20x20xf32>
    %cst_38 = arith.constant dense<0.000000e+00> : vector<20x1024xf32>
    %61 = tpu.matmul %60, %58, %cst_38 {dimension_numbers = #tpu.dot_dimension_numbers<[1], [0], [0], [1], [0, 0, 1, 1], [], []>} : vector<20x20xf32>, vector<20x1024xf32>, vector<20x1024xf32> -> vector<20x1024xf32>
    %c6_39 = arith.constant 6 : index
    %c0_40 = arith.constant 0 : index
    %c0_41 = arith.constant 0 : index
    %62 = vector.load %arg3[%c6_39, %c0_40, %c0_41] : memref<9x20x1xf32, #tpu.memory_space<vmem>>, vector<1x20x1xf32>
    %63 = vector.shape_cast %62 : vector<1x20x1xf32> to vector<20x1xf32>
    %64 = vector.broadcast %63 : vector<20x1xf32> to vector<20x1024xf32>
    %65 = arith.addf %61, %64 : vector<20x1024xf32>
    %66 = math.tanh %65 : vector<20x1024xf32>
    %c7 = arith.constant 7 : index
    %c0_42 = arith.constant 0 : index
    %c0_43 = arith.constant 0 : index
    %67 = vector.load %arg2[%c7, %c0_42, %c0_43] : memref<9x20x20xf32, #tpu.memory_space<vmem>>, vector<1x20x20xf32>
    %68 = vector.shape_cast %67 : vector<1x20x20xf32> to vector<20x20xf32>
    %cst_44 = arith.constant dense<0.000000e+00> : vector<20x1024xf32>
    %69 = tpu.matmul %68, %66, %cst_44 {dimension_numbers = #tpu.dot_dimension_numbers<[1], [0], [0], [1], [0, 0, 1, 1], [], []>} : vector<20x20xf32>, vector<20x1024xf32>, vector<20x1024xf32> -> vector<20x1024xf32>
    %c7_45 = arith.constant 7 : index
    %c0_46 = arith.constant 0 : index
    %c0_47 = arith.constant 0 : index
    %70 = vector.load %arg3[%c7_45, %c0_46, %c0_47] : memref<9x20x1xf32, #tpu.memory_space<vmem>>, vector<1x20x1xf32>
    %71 = vector.shape_cast %70 : vector<1x20x1xf32> to vector<20x1xf32>
    %72 = vector.broadcast %71 : vector<20x1xf32> to vector<20x1024xf32>
    %73 = arith.addf %69, %72 : vector<20x1024xf32>
    %74 = math.tanh %73 : vector<20x1024xf32>
    %c8 = arith.constant 8 : index
    %c0_48 = arith.constant 0 : index
    %c0_49 = arith.constant 0 : index
    %75 = vector.load %arg2[%c8, %c0_48, %c0_49] : memref<9x20x20xf32, #tpu.memory_space<vmem>>, vector<1x20x20xf32>
    %76 = vector.shape_cast %75 : vector<1x20x20xf32> to vector<20x20xf32>
    %77 = vector.extract_strided_slice %76 {offsets = [0, 0], sizes = [20, 1], strides = [1, 1]} : vector<20x20xf32> to vector<20x1xf32>
    %c8_50 = arith.constant 8 : index
    %c0_51 = arith.constant 0 : index
    %c0_52 = arith.constant 0 : index
    %78 = vector.load %arg3[%c8_50, %c0_51, %c0_52] : memref<9x20x1xf32, #tpu.memory_space<vmem>>, vector<1x20x1xf32>
    %79 = vector.shape_cast %78 : vector<1x20x1xf32> to vector<20x1xf32>
    %80 = vector.extract_strided_slice %79 {offsets = [0, 0], sizes = [1, 1], strides = [1, 1]} : vector<20x1xf32> to vector<1x1xf32>
    %81 = vector.broadcast %77 : vector<20x1xf32> to vector<20x1024xf32>
    %82 = arith.mulf %81, %74 : vector<20x1024xf32>
    %cst_53 = arith.constant dense<0.000000e+00> : vector<1024xf32>
    %83 = vector.multi_reduction <add>, %82, %cst_53 [0] : vector<20x1024xf32> to vector<1024xf32>
    %84 = vector.shape_cast %83 : vector<1024xf32> to vector<1x1024xf32>
    %85 = vector.broadcast %80 : vector<1x1xf32> to vector<1x1024xf32>
    %86 = arith.addf %84, %85 : vector<1x1024xf32>
    %c0_54 = arith.constant 0 : index
    %c0_55 = arith.constant 0 : index
    %87 = vector.load %arg4[%c0_54, %c0_55] : memref<1x1024xf32, #tpu.memory_space<vmem>>, vector<1x1024xf32>
    tpu.vector_store %arg4[%c0_54, %c0_55], %86 {strides = array<i32>} : memref<1x1024xf32, #tpu.memory_space<vmem>>, vector<1x1024xf32>,
    return
  }
  func.func @transform_0(%arg0: i32) -> (i32, i32) {
    %c0_i32 = arith.constant 0 : i32
    %c0_i32_0 = arith.constant 0 : i32
    return %c0_i32, %arg0 : i32, i32
  }
  func.func @transform_1(%arg0: i32) -> (i32, i32, i32) {
    %c0_i32 = arith.constant 0 : i32
    %c0_i32_0 = arith.constant 0 : i32
    %c0_i32_1 = arith.constant 0 : i32
    %c0_i32_2 = arith.constant 0 : i32
    return %c0_i32, %c0_i32_0, %c0_i32_1 : i32, i32, i32
  }
  func.func @transform_2(%arg0: i32) -> (i32, i32, i32) {
    %c0_i32 = arith.constant 0 : i32
    %c0_i32_0 = arith.constant 0 : i32
    %c0_i32_1 = arith.constant 0 : i32
    %c0_i32_2 = arith.constant 0 : i32
    return %c0_i32, %c0_i32_0, %c0_i32_1 : i32, i32, i32
  }
  func.func @transform_3(%arg0: i32) -> (i32, i32) {
    %c0_i32 = arith.constant 0 : i32
    %c0_i32_0 = arith.constant 0 : i32
    return %c0_i32, %arg0 : i32, i32
  }
}

</mosaic_0001>

<llo_original>
// kernel: tpu_custom_call.1
$region0: #{tpu_custom_call.1}
  #allocation0 [shape = 'u32[]', space=smem, size = 0x4, offset = 0x4, fixed_abs, tag = 'smem constant byte address 0x4 - core index']
  #allocation1 [shape = 'u32[72,128]{1,0:T(1,128)}', space=vmem, size = 0x9000, scoped, tag = 'internal scratch']
  %s0 = inlined_call_operand.hbm [shape: f32[2,2048], index: 0, kind: input, shape index: {}]
  %s1 = inlined_call_operand.vmem [shape: f32[9,20,20], index: 1, kind: input, shape index: {}]
  %s2 = inlined_call_operand.vmem [shape: f32[9,20,1], index: 2, kind: input, shape index: {}]
  %s3 = inlined_call_operand.hbm [shape: f32[1,2048], index: 3, kind: output, shape index: {}]
  %s4 = sld [smem:[#allocation0]]
  $region49: #{tpu_custom_call.1} parent=0
    _
  %s6 = ssub.s32 1, %s4
  %s7 = scalar_select 0, %s6, %s4
  $region1: #{tpu_custom_call.1} parent=0
    #allocation2 [shape = 'u8[16384]{0}', space=vmem, size = 0x4000, scoped, tag = 'input window, operand 0']
    #allocation3 [shape = 's32[2]{0}', space=sflag, size = 0x8, scoped, tag = 'scoped memory for tpu_custom_call.1']
    #allocation4 [shape = 's32[2]{0}', space=sflag, size = 0x8, scoped, tag = 'scoped memory for tpu_custom_call.1']
    #allocation5 [shape = 'u8[8192]{0}', space=vmem, size = 0x2000, scoped, tag = 'output window, operand 0']
    %8 = vsyncpa [#allocation3], 0
    %s9 = scalar_lea.sflag [#allocation3], 1
    %10 = vsyncpa %s9, 0
    %11 = vsyncpa [#allocation4], 0
    %s12 = scalar_lea.sflag [#allocation4], 1
    %13 = vsyncpa %s12, 0
    loop: start=0, step=1, limit=4
    $region2: #{tpu_custom_call.1} parent=1 // loop_pre_header
      _
    $region3: #{tpu_custom_call.1} parent=1 // loop_header
      %s15 = sphi 0, %s19
      %p16 = scmp.ge.s32.totalorder %s15, 4
      %s25 = sphi 0, %s27
      %s28 = sphi 0, %s25
      %s29 = sphi 0, %s28
      %s45 = sphi 0, %s29
      %s49 = sphi 0, %s49
      %s51 = sphi 0, %s49
      %s52 = sphi 0, %s51
      %s66 = sphi 0, %s52
      %s70 = sphi 0, %s70
      %s72 = sphi 0, %s70
      %s73 = sphi 0, %s72
      %s87 = sphi 0, %s73
      %s93 = sphi 0, %s95
      %s96 = sphi 0, %s93
      %s97 = sphi 0, %s96
      %s113 = sphi 0, %s97
    $region4: #{tpu_custom_call.1} parent=1 // loop_header_branch
      %18 = sbr.rel (%p16) target = $region8
    $region5: #{tpu_custom_call.1} parent=1 // loop_body
      %s20 = ssub.s32 %s15, 1
      %s21 = ssub.s32 %s15, 2
      %s22 = sadd.s32 %s15, 1
      %s23 = ssub.s32 %s15, %s22
      %p24 = scmp.eq.s32.totalorder %s23, 0
      %s26 = sadd.s32 %s25, 1
      %s27 = scalar_select %p24, %s25, %s26
      %p30 = pneg %p24
      %p31 = scmp.eq.s32.totalorder %s15, 1
      %p32 = por %p30, %p31
      %p33 = scmp.ne.s32.totalorder %s25, %s28
      %p34 = scmp.eq.s32.totalorder %s15, 0
      %p35 = por %p33, %p34
      %p36 = scmp.ne.s32.totalorder %s25, %s28
      %p37 = scmp.eq.s32.totalorder %s20, 1
      %p38 = por %p36, %p37
      %p39 = scmp.ne.s32.totalorder %s28, %s29
      %p40 = scmp.eq.s32.totalorder %s20, 0
      %p41 = por %p39, %p40
      %p42 = scmp.ne.s32.totalorder %s28, %s29
      %p43 = scmp.eq.s32.totalorder %s21, 1
      %p44 = por %p42, %p43
      %p46 = scmp.ne.s32.totalorder %s29, %s45
      %p47 = scmp.eq.s32.totalorder %s21, 0
      %p48 = por %p46, %p47
      %s50 = sadd.s32 %s49, 1
      %p53 = scmp.eq.s32.totalorder %s15, 1
      %p54 = scmp.ne.s32.totalorder %s49, %s51
      %p55 = scmp.eq.s32.totalorder %s15, 0
      %p56 = por %p54, %p55
      %p57 = scmp.ne.s32.totalorder %s49, %s51
      %p58 = scmp.eq.s32.totalorder %s20, 1
      %p59 = por %p57, %p58
      %p60 = scmp.ne.s32.totalorder %s51, %s52
      %p61 = scmp.eq.s32.totalorder %s20, 0
      %p62 = por %p60, %p61
      %p63 = scmp.ne.s32.totalorder %s51, %s52
      %p64 = scmp.eq.s32.totalorder %s21, 1
      %p65 = por %p63, %p64
      %p67 = scmp.ne.s32.totalorder %s52, %s66
      %p68 = scmp.eq.s32.totalorder %s21, 0
      %p69 = por %p67, %p68
      %s71 = sadd.s32 %s70, 1
      %p74 = scmp.eq.s32.totalorder %s15, 1
      %p75 = scmp.ne.s32.totalorder %s70, %s72
      %p76 = scmp.eq.s32.totalorder %s15, 0
      %p77 = por %p75, %p76
      %p78 = scmp.ne.s32.totalorder %s70, %s72
      %p79 = scmp.eq.s32.totalorder %s20, 1
      %p80 = por %p78, %p79
      %p81 = scmp.ne.s32.totalorder %s72, %s73
      %p82 = scmp.eq.s32.totalorder %s20, 0
      %p83 = por %p81, %p82
      %p84 = scmp.ne.s32.totalorder %s72, %s73
      %p85 = scmp.eq.s32.totalorder %s21, 1
      %p86 = por %p84, %p85
      %p88 = scmp.ne.s32.totalorder %s73, %s87
      %p89 = scmp.eq.s32.totalorder %s21, 0
      %p90 = por %p88, %p89
      %s91 = ssub.s32 %s15, %s22
      %p92 = scmp.eq.s32.totalorder %s91, 0
      %s94 = sadd.s32 %s93, 1
      %s95 = scalar_select %p92, %s93, %s94
      %p98 = pneg %p92
      %p99 = scmp.eq.s32.totalorder %s15, 1
      %p100 = por %p98, %p99
      %p101 = scmp.ne.s32.totalorder %s93, %s96
      %p102 = scmp.eq.s32.totalorder %s15, 0
      %p103 = por %p101, %p102
      %p104 = scmp.ne.s32.totalorder %s93, %s96
      %p105 = scmp.eq.s32.totalorder %s20, 1
      %p106 = por %p104, %p105
      %p107 = scmp.ne.s32.totalorder %s96, %s97
      %p108 = scmp.eq.s32.totalorder %s20, 0
      %p109 = por %p107, %p108
      %p110 = scmp.ne.s32.totalorder %s96, %s97
      %p111 = scmp.eq.s32.totalorder %s21, 1
      %p112 = por %p110, %p111
      %p114 = scmp.ne.s32.totalorder %s97, %s113
      %p115 = scmp.eq.s32.totalorder %s21, 0
      %p116 = por %p114, %p115
      %p117 = scmp.le.s32.totalorder 1, %s15
      %p118 = scmp.lt.s32.totalorder %s15, 3
      %p119 = pnand %p117, %p118
      %p120 = pneg %p119
      // Predicated region
      $region9: #{tpu_custom_call.1} parent=5 // pred_check
        _
      $region10: #{tpu_custom_call.1} parent=5 // pred_check_branch
        %122 = sbr.rel (%p119) target = $region12
      $region11: #{tpu_custom_call.1} parent=5 // pred_region
        %s123 = ssub.s32 %s15, 1
        // Predicated region
        $region13: #{tpu_custom_call.1} parent=11 // pred_check
          %p124 = pneg %p62
        $region14: #{tpu_custom_call.1} parent=11 // pred_check_branch
          %126 = sbr.rel (%p124) target = $region16
        $region15: #{tpu_custom_call.1} parent=11 // pred_region
          _
        $region16: #{tpu_custom_call.1} parent=11 // pred_fallthru
          _
        // Predicated region
        $region17: #{tpu_custom_call.1} parent=11 // pred_check
          %p127 = pneg %p83
        $region18: #{tpu_custom_call.1} parent=11 // pred_check_branch
          %129 = sbr.rel (%p127) target = $region20
        $region19: #{tpu_custom_call.1} parent=11 // pred_region
          _
        $region20: #{tpu_custom_call.1} parent=11 // pred_fallthru
          _
      $region12: #{tpu_custom_call.1} parent=5 // pred_fallthru
        _
      %p130 = scmp.lt.s32.totalorder %s15, 2
      // Predicated region
      $region21: #{tpu_custom_call.1} parent=5 // pred_check
        %p131 = pneg %p130
      $region22: #{tpu_custom_call.1} parent=5 // pred_check_branch
        %133 = sbr.rel (%p131) target = $region24
      $region23: #{tpu_custom_call.1} parent=5 // pred_region
        // Predicated region
        $region25: #{tpu_custom_call.1} parent=23 // pred_check
          %p134 = pneg %p35
        $region26: #{tpu_custom_call.1} parent=23 // pred_check_branch
          %136 = sbr.rel (%p134) target = $region28
        $region27: #{tpu_custom_call.1} parent=23 // pred_region
          %s137 = sand.u32 %s25, 1
          %s138 = scalar_lea.sflag [#allocation3], %s137
          %s139 = sand.u32 %s25, 1
          %s140 = smul.addr %s139, 16
          %s141 = scalar_lea.vmem [#allocation2], %s140
          %s142 = smul.u32 8, %s15
          %144 = vsyncadd %s138, 0
          %s145 = smul.addr %s142, 2
          %s146 = scalar_lea.hbm %s0, %s145
          %s148 = sshll.u32 %s146, 4
          %s149 = int_to_ptr.hbm [resolvable:$true] %s148
          %s150 = sshll.u32 %s141, 4
          %s151 = int_to_ptr.vmem [resolvable:$true] %s150
          %153 = dma.hbm_to_vmem [thread:$0]  %s149, 256, %s151, %s138
        $region28: #{tpu_custom_call.1} parent=23 // pred_fallthru
          _
      $region24: #{tpu_custom_call.1} parent=5 // pred_fallthru
        _
      %p154 = scmp.le.s32.totalorder 1, %s15
      %p155 = scmp.lt.s32.totalorder %s15, 3
      %p156 = pnand %p154, %p155
      %p157 = pneg %p156
      // Predicated region
      $region29: #{tpu_custom_call.1} parent=5 // pred_check
        _
      $region30: #{tpu_custom_call.1} parent=5 // pred_check_branch
        %159 = sbr.rel (%p156) target = $region32
      $region31: #{tpu_custom_call.1} parent=5 // pred_region
        %s160 = ssub.s32 %s15, 1
        %s161 = sand.u32 %s28, 1
        %s162 = scalar_lea.sflag [#allocation3], %s161
        %s163 = sand.u32 %s28, 1
        %s164 = smul.addr %s163, 16
        %s165 = scalar_lea.vmem [#allocation2], %s164
        // Predicated region
        $region33: #{tpu_custom_call.1} parent=31 // pred_check
          %p166 = pneg %p41
        $region34: #{tpu_custom_call.1} parent=31 // pred_check_branch
          %168 = sbr.rel (%p166) target = $region36
        $region35: #{tpu_custom_call.1} parent=31 // pred_region
          %170 = dma.done %s162, 256
        $region36: #{tpu_custom_call.1} parent=31 // pred_fallthru
          _
        %s171 = sand.u32 %s28, 1
        %s172 = scalar_lea.sflag [#allocation3], %s171
        %s173 = sand.u32 %s28, 1
        %s174 = smul.addr %s173, 16
        %s175 = scalar_lea.vmem [#allocation2], %s174
        %p176 = pneg %p41
        %p177 = pneg %p38
        %p178 = pneg %p62
        %p179 = pneg %p59
        %p180 = pneg %p83
        %p181 = pneg %p80
        %p182 = pneg %p109
        %p183 = pneg %p106
        %s184 = sand.u32 %s96, 1
        %s185 = scalar_lea.sflag [#allocation4], %s184
        %s186 = sand.u32 %s96, 1
        %s187 = smul.addr %s186, 8
        %s188 = scalar_lea.vmem [#allocation5], %s187
        %s189 = smul.u32 8, %s20
        %s190 = smul.u32 8, %s20
        %v191 = vld [vmem:[%s165] sm:$0xff]
        %v192 = vld [vmem:[%s165 + $0x8] sm:$0xff]
        %v193 = vld [vmem:[%s1] sm:$0xff]
        %v194 = vld [vmem:[%s1 + $0x8] sm:$0xff]
        %v195 = vld [vmem:[%s1 + $0x10] sm:$0xf]
        %v196 = vld [vmem:[%s2] sm:$0xff]
        %v197 = vld [vmem:[%s2 + $0x8] sm:$0xff]
        %v198 = vld [vmem:[%s2 + $0x10] sm:$0xf]
        %200 = vset.pattern.permute.xlu0 0
        %201 = vperm.xlu0 %200, %v193
        %v202 = vpop.permute.xlu0 %201
        %205 = vset.pattern.permute.xlu0 0
        %206 = vperm.xlu0 %205, %v194
        %v207 = vpop.permute.xlu0 %206
        %210 = vset.pattern.permute.xlu0 0
        %211 = vperm.xlu0 %210, %v195
        %v212 = vpop.permute.xlu0 %211
        %v216 = vperm.slane %v191, 0
        %v217 = vperm.slane %v191, 2
        %v218 = vperm.slane %v191, 4
        %v219 = vperm.slane %v191, 6
        %v220 = vperm.slane %v192, 0
        %v221 = vperm.slane %v192, 2
        %v222 = vperm.slane %v192, 4
        %v223 = vperm.slane %v192, 6
        %v232 = vperm.slane %v216, 0
        %v233 = vperm.slane %v217, 0
        %v234 = vperm.slane %v218, 0
        %v235 = vperm.slane %v219, 0
        %v236 = vperm.slane %v220, 0
        %v237 = vperm.slane %v221, 0
        %v238 = vperm.slane %v222, 0
        %v239 = vperm.slane %v223, 0
        %v240 = vmul.f32 %v202, %v232
        %v241 = vmul.f32 %v202, %v233
        %v242 = vmul.f32 %v202, %v234
        %v243 = vmul.f32 %v202, %v235
        %v244 = vmul.f32 %v202, %v236
        %v245 = vmul.f32 %v202, %v237
        %v246 = vmul.f32 %v202, %v238
        %v247 = vmul.f32 %v202, %v239
        %v248 = vmul.f32 %v207, %v232
        %v249 = vmul.f32 %v207, %v233
        %v250 = vmul.f32 %v207, %v234
        %v251 = vmul.f32 %v207, %v235
        %v252 = vmul.f32 %v207, %v236
        %v253 = vmul.f32 %v207, %v237
        %v254 = vmul.f32 %v207, %v238
        %v255 = vmul.f32 %v207, %v239
        %v256 = vmul.f32 %v212, %v232
        %v257 = vmul.f32 %v212, %v233
        %v258 = vmul.f32 %v212, %v234
        %v259 = vmul.f32 %v212, %v235
        %v260 = vmul.f32 %v212, %v236
        %v261 = vmul.f32 %v212, %v237
        %v262 = vmul.f32 %v212, %v238
        %v263 = vmul.f32 %v212, %v239
        %264 = vset.pattern.permute.xlu0 1
        %265 = vperm.xlu0 %264, %v193
        %v266 = vpop.permute.xlu0 %265
        %268 = vset.pattern.permute.xlu0 1
        %269 = vperm.xlu0 %268, %v194
        %v270 = vpop.permute.xlu0 %269
        %272 = vset.pattern.permute.xlu0 1
        %273 = vperm.xlu0 %272, %v195
        %v274 = vpop.permute.xlu0 %273
        %v276 = vperm.slane %v191, 1
        %v277 = vperm.slane %v191, 3
        %v278 = vperm.slane %v191, 5
        %v279 = vperm.slane %v191, 7
        %v280 = vperm.slane %v192, 1
        %v281 = vperm.slane %v192, 3
        %v282 = vperm.slane %v192, 5
        %v283 = vperm.slane %v192, 7
        %v292 = vperm.slane %v276, 1
        %v293 = vperm.slane %v277, 1
        %v294 = vperm.slane %v278, 1
        %v295 = vperm.slane %v279, 1
        %v296 = vperm.slane %v280, 1
        %v297 = vperm.slane %v281, 1
        %v298 = vperm.slane %v282, 1
        %v299 = vperm.slane %v283, 1
        %v300 = vmul.f32 %v266, %v292
        %v301 = vmul.f32 %v266, %v293
        %v302 = vmul.f32 %v266, %v294
        %v303 = vmul.f32 %v266, %v295
        %v304 = vmul.f32 %v266, %v296
        %v305 = vmul.f32 %v266, %v297
        %v306 = vmul.f32 %v266, %v298
        %v307 = vmul.f32 %v266, %v299
        %v308 = vmul.f32 %v270, %v292
        %v309 = vmul.f32 %v270, %v293
        %v310 = vmul.f32 %v270, %v294
        %v311 = vmul.f32 %v270, %v295
        %v312 = vmul.f32 %v270, %v296
        %v313 = vmul.f32 %v270, %v297
        %v314 = vmul.f32 %v270, %v298
        %v315 = vmul.f32 %v270, %v299
        %v316 = vmul.f32 %v274, %v292
        %v317 = vmul.f32 %v274, %v293
        %v318 = vmul.f32 %v274, %v294
        %v319 = vmul.f32 %v274, %v295
        %v320 = vmul.f32 %v274, %v296
        %v321 = vmul.f32 %v274, %v297
        %v322 = vmul.f32 %v274, %v298
        %v323 = vmul.f32 %v274, %v299
        %v324 = vadd.f32 %v240, %v300
        %v325 = vadd.f32 %v241, %v301
        %v326 = vadd.f32 %v242, %v302
        %v327 = vadd.f32 %v243, %v303
        %v328 = vadd.f32 %v244, %v304
        %v329 = vadd.f32 %v245, %v305
        %v330 = vadd.f32 %v246, %v306
        %v331 = vadd.f32 %v247, %v307
        %v332 = vadd.f32 %v248, %v308
        %v333 = vadd.f32 %v249, %v309
        %v334 = vadd.f32 %v250, %v310
        %v335 = vadd.f32 %v251, %v311
        %v336 = vadd.f32 %v252, %v312
        %v337 = vadd.f32 %v253, %v313
        %v338 = vadd.f32 %v254, %v314
        %v339 = vadd.f32 %v255, %v315
        %v340 = vadd.f32 %v256, %v316
        %v341 = vadd.f32 %v257, %v317
        %v342 = vadd.f32 %v258, %v318
        %v343 = vadd.f32 %v259, %v319
        %v344 = vadd.f32 %v260, %v320
        %v345 = vadd.f32 %v261, %v321
        %v346 = vadd.f32 %v262, %v322
        %v347 = vadd.f32 %v263, %v323
        %349 = vset.pattern.permute.xlu0 0
        %350 = vperm.xlu0 %349, %v196
        %v351 = vpop.permute.xlu0 %350
        %354 = vset.pattern.permute.xlu0 0
        %355 = vperm.xlu0 %354, %v197
        %v356 = vpop.permute.xlu0 %355
        %359 = vset.pattern.permute.xlu0 0
        %360 = vperm.xlu0 %359, %v198
        %v361 = vpop.permute.xlu0 %360
        %v363 = vadd.f32 %v324, %v351
        %v364 = vadd.f32 %v325, %v351
        %v365 = vadd.f32 %v326, %v351
        %v366 = vadd.f32 %v327, %v351
        %v367 = vadd.f32 %v328, %v351
        %v368 = vadd.f32 %v329, %v351
        %v369 = vadd.f32 %v330, %v351
        %v370 = vadd.f32 %v331, %v351
        %v371 = vadd.f32 %v332, %v356
        %v372 = vadd.f32 %v333, %v356
        %v373 = vadd.f32 %v334, %v356
        %v374 = vadd.f32 %v335, %v356
        %v375 = vadd.f32 %v336, %v356
        %v376 = vadd.f32 %v337, %v356
        %v377 = vadd.f32 %v338, %v356
        %v378 = vadd.f32 %v339, %v356
        %v379 = vadd.f32 %v340, %v361
        %v380 = vadd.f32 %v341, %v361
        %v381 = vadd.f32 %v342, %v361
        %v382 = vadd.f32 %v343, %v361
        %v383 = vadd.f32 %v344, %v361
        %v384 = vadd.f32 %v345, %v361
        %v385 = vadd.f32 %v346, %v361
        %v386 = vadd.f32 %v347, %v361
        %v387 = vtanh.pop %v363
        %v388 = vtanh.pop %v364
        %v389 = vtanh.pop %v365
        %v390 = vtanh.pop %v366
        %v391 = vtanh.pop %v367
        %v392 = vtanh.pop %v368
        %v393 = vtanh.pop %v369
        %v394 = vtanh.pop %v370
        %v395 = vtanh.pop %v371
        %v396 = vtanh.pop %v372
        %v397 = vtanh.pop %v373
        %v398 = vtanh.pop %v374
        %v399 = vtanh.pop %v375
        %v400 = vtanh.pop %v376
        %v401 = vtanh.pop %v377
        %v402 = vtanh.pop %v378
        %v403 = vtanh.pop %v379
        %v404 = vtanh.pop %v380
        %v405 = vtanh.pop %v381
        %v406 = vtanh.pop %v382
        %v407 = vtanh.pop %v383
        %v408 = vtanh.pop %v384
        %v409 = vtanh.pop %v385
        %v410 = vtanh.pop %v386
        %s411 = scalar_lea.vmem %s1, 24
        %v412 = vld [vmem:[%s411] sm:$0xff]
        %v413 = vld [vmem:[%s411 + $0x8] sm:$0xff]
        %v414 = vld [vmem:[%s411 + $0x10] sm:$0xf]
        %s415 = scalar_lea.vmem %s2, 24
        %v416 = vld [vmem:[%s415] sm:$0xff]
        %v417 = vld [vmem:[%s415 + $0x8] sm:$0xff]
        %v418 = vld [vmem:[%s415 + $0x10] sm:$0xf]
        %420 = vset.pattern.permute.xlu0 0
        %421 = vperm.xlu0 %420, %v416
        %v422 = vpop.permute.xlu0 %421
        %425 = vset.pattern.permute.xlu0 0
        %426 = vperm.xlu0 %425, %v417
        %v427 = vpop.permute.xlu0 %426
        %430 = vset.pattern.permute.xlu0 0
        %431 = vperm.xlu0 %430, %v418
        %v432 = vpop.permute.xlu0 %431
        %vm434 = vcmask 162816
        %v436 = vsel %vm434, %v412, 0
        %v439 = vsel %vm434, %v413, 0
        %v442 = vsel %vm434, %v414, 0
        %vm444 = vcmask 1043456
        %v446 = vsel %vm444, %v403, 0
        %v449 = vsel %vm444, %v404, 0
        %v452 = vsel %vm444, %v405, 0
        %v455 = vsel %vm444, %v406, 0
        %v458 = vsel %vm444, %v407, 0
        %v461 = vsel %vm444, %v408, 0
        %v464 = vsel %vm444, %v409, 0
        %v467 = vsel %vm444, %v410, 0
        %469 = vmatpush.msra.mxu0 0.0
        %470 = vmatpush.msra.mxu0 0.0
        %471 = vmatpush.msra.mxu0 0.0
        %472 = vmatpush.msra.mxu0 0.0
        %473 = vmatpush.msra.mxu0 0.0
        %474 = vmatpush.msra.mxu0 0.0
        %475 = vmatpush.msra.mxu0 0.0
        %476 = vmatpush.msra.mxu0 0.0
        %477 = vmatpush.msra.mxu0 0.0
        %478 = vmatpush.msra.mxu0 0.0
        %479 = vmatpush.msra.mxu0 0.0
        %480 = vmatpush.msra.mxu0 0.0
        %481 = vmatpush.msra.mxu0 0.0
        %482 = vmatpush.msra.mxu0 %v446
        %483 = vmatpush.msra.mxu0 %v395
        %484 = vmatpush.msra.mxu0 %v387
        %485 = vmatmul.f32.gmra.mxu0 %v436
        %v486 = vpop.f32.mrf.mxu0
        %v487 = vadd.f32 %v422, %v486
        %488 = vmatmul.f32.gmra.mxu0 %v439
        %v489 = vpop.f32.mrf.mxu0
        %v490 = vadd.f32 %v427, %v489
        %491 = vmatmul.f32.gmra.mxu0 %v442
        %v492 = vpop.f32.mrf.mxu0
        %v493 = vadd.f32 %v432, %v492
        %494 = vdwg.mxu0
        %495 = vmatpush.msra.mxu0 0.0
        %496 = vmatpush.msra.mxu0 0.0
        %497 = vmatpush.msra.mxu0 0.0
        %498 = vmatpush.msra.mxu0 0.0
        %499 = vmatpush.msra.mxu0 0.0
        %500 = vmatpush.msra.mxu0 0.0
        %501 = vmatpush.msra.mxu0 0.0
        %502 = vmatpush.msra.mxu0 0.0
        %503 = vmatpush.msra.mxu0 0.0
        %504 = vmatpush.msra.mxu0 0.0
        %505 = vmatpush.msra.mxu0 0.0
        %506 = vmatpush.msra.mxu0 0.0
        %507 = vmatpush.msra.mxu0 0.0
        %508 = vmatpush.msra.mxu0 %v449
        %509 = vmatpush.msra.mxu0 %v396
        %510 = vmatpush.msra.mxu0 %v388
        %511 = vmatmul.f32.gmra.mxu0 %v436
        %v512 = vpop.f32.mrf.mxu0
        %v513 = vadd.f32 %v422, %v512
        %514 = vmatmul.f32.gmra.mxu0 %v439
        %v515 = vpop.f32.mrf.mxu0
        %v516 = vadd.f32 %v427, %v515
        %517 = vmatmul.f32.gmra.mxu0 %v442
        %v518 = vpop.f32.mrf.mxu0
        %v519 = vadd.f32 %v432, %v518
        %520 = vdwg.mxu0
        %521 = vmatpush.msra.mxu0 0.0
        %522 = vmatpush.msra.mxu0 0.0
        %523 = vmatpush.msra.mxu0 0.0
        %524 = vmatpush.msra.mxu0 0.0
        %525 = vmatpush.msra.mxu0 0.0
        %526 = vmatpush.msra.mxu0 0.0
        %527 = vmatpush.msra.mxu0 0.0
        %528 = vmatpush.msra.mxu0 0.0
        %529 = vmatpush.msra.mxu0 0.0
        %530 = vmatpush.msra.mxu0 0.0
        %531 = vmatpush.msra.mxu0 0.0
        %532 = vmatpush.msra.mxu0 0.0
        %533 = vmatpush.msra.mxu0 0.0
        %534 = vmatpush.msra.mxu0 %v452
        %535 = vmatpush.msra.mxu0 %v397
        %536 = vmatpush.msra.mxu0 %v389
        %537 = vmatmul.f32.gmra.mxu0 %v436
        %v538 = vpop.f32.mrf.mxu0
        %v539 = vadd.f32 %v422, %v538
        %540 = vmatmul.f32.gmra.mxu0 %v439
        %v541 = vpop.f32.mrf.mxu0
        %v542 = vadd.f32 %v427, %v541
        %543 = vmatmul.f32.gmra.mxu0 %v442
        %v544 = vpop.f32.mrf.mxu0
        %v545 = vadd.f32 %v432, %v544
        %546 = vdwg.mxu0
        %547 = vmatpush.msra.mxu0 0.0
        %548 = vmatpush.msra.mxu0 0.0
        %549 = vmatpush.msra.mxu0 0.0
        %550 = vmatpush.msra.mxu0 0.0
        %551 = vmatpush.msra.mxu0 0.0
        %552 = vmatpush.msra.mxu0 0.0
        %553 = vmatpush.msra.mxu0 0.0
        %554 = vmatpush.msra.mxu0 0.0
        %555 = vmatpush.msra.mxu0 0.0
        %556 = vmatpush.msra.mxu0 0.0
        %557 = vmatpush.msra.mxu0 0.0
        %558 = vmatpush.msra.mxu0 0.0
        %559 = vmatpush.msra.mxu0 0.0
        %560 = vmatpush.msra.mxu0 %v455
        %561 = vmatpush.msra.mxu0 %v398
        %562 = vmatpush.msra.mxu0 %v390
        %563 = vmatmul.f32.gmra.mxu0 %v436
        %v564 = vpop.f32.mrf.mxu0
        %v565 = vadd.f32 %v422, %v564
        %566 = vmatmul.f32.gmra.mxu0 %v439
        %v567 = vpop.f32.mrf.mxu0
        %v568 = vadd.f32 %v427, %v567
        %569 = vmatmul.f32.gmra.mxu0 %v442
        %v570 = vpop.f32.mrf.mxu0
        %v571 = vadd.f32 %v432, %v570
        %572 = vdwg.mxu0
        %573 = vmatpush.msra.mxu0 0.0
        %574 = vmatpush.msra.mxu0 0.0
        %575 = vmatpush.msra.mxu0 0.0
        %576 = vmatpush.msra.mxu0 0.0
        %577 = vmatpush.msra.mxu0 0.0
        %578 = vmatpush.msra.mxu0 0.0
        %579 = vmatpush.msra.mxu0 0.0
        %580 = vmatpush.msra.mxu0 0.0
        %581 = vmatpush.msra.mxu0 0.0
        %582 = vmatpush.msra.mxu0 0.0
        %583 = vmatpush.msra.mxu0 0.0
        %584 = vmatpush.msra.mxu0 0.0
        %585 = vmatpush.msra.mxu0 0.0
        %586 = vmatpush.msra.mxu0 %v458
        %587 = vmatpush.msra.mxu0 %v399
        %588 = vmatpush.msra.mxu0 %v391
        %589 = vmatmul.f32.gmra.mxu0 %v436
        %v590 = vpop.f32.mrf.mxu0
        %v591 = vadd.f32 %v422, %v590
        %592 = vmatmul.f32.gmra.mxu0 %v439
        %v593 = vpop.f32.mrf.mxu0
        %v594 = vadd.f32 %v427, %v593
        %595 = vmatmul.f32.gmra.mxu0 %v442
        %v596 = vpop.f32.mrf.mxu0
        %v597 = vadd.f32 %v432, %v596
        %598 = vdwg.mxu0
        %599 = vmatpush.msra.mxu0 0.0
        %600 = vmatpush.msra.mxu0 0.0
        %601 = vmatpush.msra.mxu0 0.0
        %602 = vmatpush.msra.mxu0 0.0
        %603 = vmatpush.msra.mxu0 0.0
        %604 = vmatpush.msra.mxu0 0.0
        %605 = vmatpush.msra.mxu0 0.0
        %606 = vmatpush.msra.mxu0 0.0
        %607 = vmatpush.msra.mxu0 0.0
        %608 = vmatpush.msra.mxu0 0.0
        %609 = vmatpush.msra.mxu0 0.0
        %610 = vmatpush.msra.mxu0 0.0
        %611 = vmatpush.msra.mxu0 0.0
        %612 = vmatpush.msra.mxu0 %v461
        %613 = vmatpush.msra.mxu0 %v400
        %614 = vmatpush.msra.mxu0 %v392
        %615 = vmatmul.f32.gmra.mxu0 %v436
        %v616 = vpop.f32.mrf.mxu0
        %v617 = vadd.f32 %v422, %v616
        %618 = vmatmul.f32.gmra.mxu0 %v439
        %v619 = vpop.f32.mrf.mxu0
        %v620 = vadd.f32 %v427, %v619
        %621 = vmatmul.f32.gmra.mxu0 %v442
        %v622 = vpop.f32.mrf.mxu0
        %v623 = vadd.f32 %v432, %v622
        %624 = vdwg.mxu0
        %625 = vmatpush.msra.mxu0 0.0
        %626 = vmatpush.msra.mxu0 0.0
        %627 = vmatpush.msra.mxu0 0.0
        %628 = vmatpush.msra.mxu0 0.0
        %629 = vmatpush.msra.mxu0 0.0
        %630 = vmatpush.msra.mxu0 0.0
        %631 = vmatpush.msra.mxu0 0.0
        %632 = vmatpush.msra.mxu0 0.0
        %633 = vmatpush.msra.mxu0 0.0
        %634 = vmatpush.msra.mxu0 0.0
        %635 = vmatpush.msra.mxu0 0.0
        %636 = vmatpush.msra.mxu0 0.0
        %637 = vmatpush.msra.mxu0 0.0
        %638 = vmatpush.msra.mxu0 %v464
        %639 = vmatpush.msra.mxu0 %v401
        %640 = vmatpush.msra.mxu0 %v393
        %641 = vmatmul.f32.gmra.mxu0 %v436
        %v642 = vpop.f32.mrf.mxu0
        %v643 = vadd.f32 %v422, %v642
        %644 = vmatmul.f32.gmra.mxu0 %v439
        %v645 = vpop.f32.mrf.mxu0
        %v646 = vadd.f32 %v427, %v645
        %647 = vmatmul.f32.gmra.mxu0 %v442
        %v648 = vpop.f32.mrf.mxu0
        %v649 = vadd.f32 %v432, %v648
        %650 = vdwg.mxu0
        %651 = vmatpush.msra.mxu0 0.0
        %652 = vmatpush.msra.mxu0 0.0
        %653 = vmatpush.msra.mxu0 0.0
        %654 = vmatpush.msra.mxu0 0.0
        %655 = vmatpush.msra.mxu0 0.0
        %656 = vmatpush.msra.mxu0 0.0
        %657 = vmatpush.msra.mxu0 0.0
        %658 = vmatpush.msra.mxu0 0.0
        %659 = vmatpush.msra.mxu0 0.0
        %660 = vmatpush.msra.mxu0 0.0
        %661 = vmatpush.msra.mxu0 0.0
        %662 = vmatpush.msra.mxu0 0.0
        %663 = vmatpush.msra.mxu0 0.0
        %664 = vmatpush.msra.mxu0 %v467
        %665 = vmatpush.msra.mxu0 %v402
        %666 = vmatpush.msra.mxu0 %v394
        %667 = vmatmul.f32.gmra.mxu0 %v436
        %v668 = vpop.f32.mrf.mxu0
        %v669 = vadd.f32 %v422, %v668
        %670 = vmatmul.f32.gmra.mxu0 %v439
        %v671 = vpop.f32.mrf.mxu0
        %v672 = vadd.f32 %v427, %v671
        %673 = vmatmul.f32.gmra.mxu0 %v442
        %v674 = vpop.f32.mrf.mxu0
        %v675 = vadd.f32 %v432, %v674
        %676 = vdwg.mxu0
        %v677 = vtanh.pop %v487
        %v678 = vtanh.pop %v513
        %v679 = vtanh.pop %v539
        %v680 = vtanh.pop %v565
        %v681 = vtanh.pop %v591
        %v682 = vtanh.pop %v617
        %v683 = vtanh.pop %v643
        %v684 = vtanh.pop %v669
        %v685 = vtanh.pop %v490
        %v686 = vtanh.pop %v516
        %v687 = vtanh.pop %v542
        %v688 = vtanh.pop %v568
        %v689 = vtanh.pop %v594
        %v690 = vtanh.pop %v620
        %v691 = vtanh.pop %v646
        %v692 = vtanh.pop %v672
        %v693 = vtanh.pop %v493
        %v694 = vtanh.pop %v519
        %v695 = vtanh.pop %v545
        %v696 = vtanh.pop %v571
        %v697 = vtanh.pop %v597
        %v698 = vtanh.pop %v623
        %v699 = vtanh.pop %v649
        %v700 = vtanh.pop %v675
        %s701 = scalar_lea.vmem %s1, 48
        %v702 = vld [vmem:[%s701] sm:$0xff]
        %v703 = vld [vmem:[%s701 + $0x8] sm:$0xff]
        %v704 = vld [vmem:[%s701 + $0x10] sm:$0xf]
        %s705 = scalar_lea.vmem %s2, 48
        %v706 = vld [vmem:[%s705] sm:$0xff]
        %v707 = vld [vmem:[%s705 + $0x8] sm:$0xff]
        %v708 = vld [vmem:[%s705 + $0x10] sm:$0xf]
        %710 = vset.pattern.permute.xlu0 0
        %711 = vperm.xlu0 %710, %v706
        %v712 = vpop.permute.xlu0 %711
        %715 = vset.pattern.permute.xlu0 0
        %716 = vperm.xlu0 %715, %v707
        %v717 = vpop.permute.xlu0 %716
        %720 = vset.pattern.permute.xlu0 0
        %721 = vperm.xlu0 %720, %v708
        %v722 = vpop.permute.xlu0 %721
        %v725 = vsel %vm434, %v702, 0
        %v728 = vsel %vm434, %v703, 0
        %v731 = vsel %vm434, %v704, 0
        %v734 = vsel %vm444, %v693, 0
        %v737 = vsel %vm444, %v694, 0
        %v740 = vsel %vm444, %v695, 0
        %v743 = vsel %vm444, %v696, 0
        %v746 = vsel %vm444, %v697, 0
        %v749 = vsel %vm444, %v698, 0
        %v752 = vsel %vm444, %v699, 0
        %v755 = vsel %vm444, %v700, 0
        %757 = vmatpush.msra.mxu0 0.0
        %758 = vmatpush.msra.mxu0 0.0
        %759 = vmatpush.msra.mxu0 0.0
        %760 = vmatpush.msra.mxu0 0.0
        %761 = vmatpush.msra.mxu0 0.0
        %762 = vmatpush.msra.mxu0 0.0
        %763 = vmatpush.msra.mxu0 0.0
        %764 = vmatpush.msra.mxu0 0.0
        %765 = vmatpush.msra.mxu0 0.0
        %766 = vmatpush.msra.mxu0 0.0
        %767 = vmatpush.msra.mxu0 0.0
        %768 = vmatpush.msra.mxu0 0.0
        %769 = vmatpush.msra.mxu0 0.0
        %770 = vmatpush.msra.mxu0 %v734
        %771 = vmatpush.msra.mxu0 %v685
        %772 = vmatpush.msra.mxu0 %v677
        %773 = vmatmul.f32.gmra.mxu0 %v725
        %v774 = vpop.f32.mrf.mxu0
        %v775 = vadd.f32 %v712, %v774
        %776 = vmatmul.f32.gmra.mxu0 %v728
        %v777 = vpop.f32.mrf.mxu0
        %v778 = vadd.f32 %v717, %v777
        %779 = vmatmul.f32.gmra.mxu0 %v731
        %v780 = vpop.f32.mrf.mxu0
        %v781 = vadd.f32 %v722, %v780
        %782 = vdwg.mxu0
        %783 = vmatpush.msra.mxu0 0.0
        %784 = vmatpush.msra.mxu0 0.0
        %785 = vmatpush.msra.mxu0 0.0
        %786 = vmatpush.msra.mxu0 0.0
        %787 = vmatpush.msra.mxu0 0.0
        %788 = vmatpush.msra.mxu0 0.0
        %789 = vmatpush.msra.mxu0 0.0
        %790 = vmatpush.msra.mxu0 0.0
        %791 = vmatpush.msra.mxu0 0.0
        %792 = vmatpush.msra.mxu0 0.0
        %793 = vmatpush.msra.mxu0 0.0
        %794 = vmatpush.msra.mxu0 0.0
        %795 = vmatpush.msra.mxu0 0.0
        %796 = vmatpush.msra.mxu0 %v737
        %797 = vmatpush.msra.mxu0 %v686
        %798 = vmatpush.msra.mxu0 %v678
        %799 = vmatmul.f32.gmra.mxu0 %v725
        %v800 = vpop.f32.mrf.mxu0
        %v801 = vadd.f32 %v712, %v800
        %802 = vmatmul.f32.gmra.mxu0 %v728
        %v803 = vpop.f32.mrf.mxu0
        %v804 = vadd.f32 %v717, %v803
        %805 = vmatmul.f32.gmra.mxu0 %v731
        %v806 = vpop.f32.mrf.mxu0
        %v807 = vadd.f32 %v722, %v806
        %808 = vdwg.mxu0
        %809 = vmatpush.msra.mxu0 0.0
        %810 = vmatpush.msra.mxu0 0.0
        %811 = vmatpush.msra.mxu0 0.0
        %812 = vmatpush.msra.mxu0 0.0
        %813 = vmatpush.msra.mxu0 0.0
        %814 = vmatpush.msra.mxu0 0.0
        %815 = vmatpush.msra.mxu0 0.0
        %816 = vmatpush.msra.mxu0 0.0
        %817 = vmatpush.msra.mxu0 0.0
        %818 = vmatpush.msra.mxu0 0.0
        %819 = vmatpush.msra.mxu0 0.0
        %820 = vmatpush.msra.mxu0 0.0
        %821 = vmatpush.msra.mxu0 0.0
        %822 = vmatpush.msra.mxu0 %v740
        %823 = vmatpush.msra.mxu0 %v687
        %824 = vmatpush.msra.mxu0 %v679
        %825 = vmatmul.f32.gmra.mxu0 %v725
        %v826 = vpop.f32.mrf.mxu0
        %v827 = vadd.f32 %v712, %v826
        %828 = vmatmul.f32.gmra.mxu0 %v728
        %v829 = vpop.f32.mrf.mxu0
        %v830 = vadd.f32 %v717, %v829
        %831 = vmatmul.f32.gmra.mxu0 %v731
        %v832 = vpop.f32.mrf.mxu0
        %v833 = vadd.f32 %v722, %v832
        %834 = vdwg.mxu0
        %835 = vmatpush.msra.mxu0 0.0
        %836 = vmatpush.msra.mxu0 0.0
        %837 = vmatpush.msra.mxu0 0.0
        %838 = vmatpush.msra.mxu0 0.0
        %839 = vmatpush.msra.mxu0 0.0
        %840 = vmatpush.msra.mxu0 0.0
        %841 = vmatpush.msra.mxu0 0.0
        %842 = vmatpush.msra.mxu0 0.0
        %843 = vmatpush.msra.mxu0 0.0
        %844 = vmatpush.msra.mxu0 0.0
        %845 = vmatpush.msra.mxu0 0.0
        %846 = vmatpush.msra.mxu0 0.0
        %847 = vmatpush.msra.mxu0 0.0
        %848 = vmatpush.msra.mxu0 %v743
        %849 = vmatpush.msra.mxu0 %v688
        %850 = vmatpush.msra.mxu0 %v680
        %851 = vmatmul.f32.gmra.mxu0 %v725
        %v852 = vpop.f32.mrf.mxu0
        %v853 = vadd.f32 %v712, %v852
        %854 = vmatmul.f32.gmra.mxu0 %v728
        %v855 = vpop.f32.mrf.mxu0
        %v856 = vadd.f32 %v717, %v855
        %857 = vmatmul.f32.gmra.mxu0 %v731
        %v858 = vpop.f32.mrf.mxu0
        %v859 = vadd.f32 %v722, %v858
        %860 = vdwg.mxu0
        %861 = vmatpush.msra.mxu0 0.0
        %862 = vmatpush.msra.mxu0 0.0
        %863 = vmatpush.msra.mxu0 0.0
        %864 = vmatpush.msra.mxu0 0.0
        %865 = vmatpush.msra.mxu0 0.0
        %866 = vmatpush.msra.mxu0 0.0
        %867 = vmatpush.msra.mxu0 0.0
        %868 = vmatpush.msra.mxu0 0.0
        %869 = vmatpush.msra.mxu0 0.0
        %870 = vmatpush.msra.mxu0 0.0
        %871 = vmatpush.msra.mxu0 0.0
        %872 = vmatpush.msra.mxu0 0.0
        %873 = vmatpush.msra.mxu0 0.0
        %874 = vmatpush.msra.mxu0 %v746
        %875 = vmatpush.msra.mxu0 %v689
        %876 = vmatpush.msra.mxu0 %v681
        %877 = vmatmul.f32.gmra.mxu0 %v725
        %v878 = vpop.f32.mrf.mxu0
        %v879 = vadd.f32 %v712, %v878
        %880 = vmatmul.f32.gmra.mxu0 %v728
        %v881 = vpop.f32.mrf.mxu0
        %v882 = vadd.f32 %v717, %v881
        %883 = vmatmul.f32.gmra.mxu0 %v731
        %v884 = vpop.f32.mrf.mxu0
        %v885 = vadd.f32 %v722, %v884
        %886 = vdwg.mxu0
        %887 = vmatpush.msra.mxu0 0.0
        %888 = vmatpush.msra.mxu0 0.0
        %889 = vmatpush.msra.mxu0 0.0
        %890 = vmatpush.msra.mxu0 0.0
        %891 = vmatpush.msra.mxu0 0.0
        %892 = vmatpush.msra.mxu0 0.0
        %893 = vmatpush.msra.mxu0 0.0
        %894 = vmatpush.msra.mxu0 0.0
        %895 = vmatpush.msra.mxu0 0.0
        %896 = vmatpush.msra.mxu0 0.0
        %897 = vmatpush.msra.mxu0 0.0
        %898 = vmatpush.msra.mxu0 0.0
        %899 = vmatpush.msra.mxu0 0.0
        %900 = vmatpush.msra.mxu0 %v749
        %901 = vmatpush.msra.mxu0 %v690
        %902 = vmatpush.msra.mxu0 %v682
        %903 = vmatmul.f32.gmra.mxu0 %v725
        %v904 = vpop.f32.mrf.mxu0
        %v905 = vadd.f32 %v712, %v904
        %906 = vmatmul.f32.gmra.mxu0 %v728
        %v907 = vpop.f32.mrf.mxu0
        %v908 = vadd.f32 %v717, %v907
        %909 = vmatmul.f32.gmra.mxu0 %v731
        %v910 = vpop.f32.mrf.mxu0
        %v911 = vadd.f32 %v722, %v910
        %912 = vdwg.mxu0
        %913 = vmatpush.msra.mxu0 0.0
        %914 = vmatpush.msra.mxu0 0.0
        %915 = vmatpush.msra.mxu0 0.0
        %916 = vmatpush.msra.mxu0 0.0
        %917 = vmatpush.msra.mxu0 0.0
        %918 = vmatpush.msra.mxu0 0.0
        %919 = vmatpush.msra.mxu0 0.0
        %920 = vmatpush.msra.mxu0 0.0
        %921 = vmatpush.msra.mxu0 0.0
        %922 = vmatpush.msra.mxu0 0.0
        %923 = vmatpush.msra.mxu0 0.0
        %924 = vmatpush.msra.mxu0 0.0
        %925 = vmatpush.msra.mxu0 0.0
        %926 = vmatpush.msra.mxu0 %v752
        %927 = vmatpush.msra.mxu0 %v691
        %928 = vmatpush.msra.mxu0 %v683
        %929 = vmatmul.f32.gmra.mxu0 %v725
        %v930 = vpop.f32.mrf.mxu0
        %v931 = vadd.f32 %v712, %v930
        %932 = vmatmul.f32.gmra.mxu0 %v728
        %v933 = vpop.f32.mrf.mxu0
        %v934 = vadd.f32 %v717, %v933
        %935 = vmatmul.f32.gmra.mxu0 %v731
        %v936 = vpop.f32.mrf.mxu0
        %v937 = vadd.f32 %v722, %v936
        %938 = vdwg.mxu0
        %939 = vmatpush.msra.mxu0 0.0
        %940 = vmatpush.msra.mxu0 0.0
        %941 = vmatpush.msra.mxu0 0.0
        %942 = vmatpush.msra.mxu0 0.0
        %943 = vmatpush.msra.mxu0 0.0
        %944 = vmatpush.msra.mxu0 0.0
        %945 = vmatpush.msra.mxu0 0.0
        %946 = vmatpush.msra.mxu0 0.0
        %947 = vmatpush.msra.mxu0 0.0
        %948 = vmatpush.msra.mxu0 0.0
        %949 = vmatpush.msra.mxu0 0.0
        %950 = vmatpush.msra.mxu0 0.0
        %951 = vmatpush.msra.mxu0 0.0
        %952 = vmatpush.msra.mxu0 %v755
        %953 = vmatpush.msra.mxu0 %v692
        %954 = vmatpush.msra.mxu0 %v684
        %955 = vmatmul.f32.gmra.mxu0 %v725
        %v956 = vpop.f32.mrf.mxu0
        %v957 = vadd.f32 %v712, %v956
        %958 = vmatmul.f32.gmra.mxu0 %v728
        %v959 = vpop.f32.mrf.mxu0
        %v960 = vadd.f32 %v717, %v959
        %961 = vmatmul.f32.gmra.mxu0 %v731
        %v962 = vpop.f32.mrf.mxu0
        %v963 = vadd.f32 %v722, %v962
        %964 = vdwg.mxu0
        %v965 = vtanh.pop %v775
        %v966 = vtanh.pop %v801
        %v967 = vtanh.pop %v827
        %v968 = vtanh.pop %v853
        %v969 = vtanh.pop %v879
        %v970 = vtanh.pop %v905
        %v971 = vtanh.pop %v931
        %v972 = vtanh.pop %v957
        %v973 = vtanh.pop %v778
        %v974 = vtanh.pop %v804
        %v975 = vtanh.pop %v830
        %v976 = vtanh.pop %v856
        %v977 = vtanh.pop %v882
        %v978 = vtanh.pop %v908
        %v979 = vtanh.pop %v934
        %v980 = vtanh.pop %v960
        %v981 = vtanh.pop %v781
        %v982 = vtanh.pop %v807
        %v983 = vtanh.pop %v833
        %v984 = vtanh.pop %v859
        %v985 = vtanh.pop %v885
        %v986 = vtanh.pop %v911
        %v987 = vtanh.pop %v937
        %v988 = vtanh.pop %v963
        %s989 = scalar_lea.vmem %s1, 72
        %v990 = vld [vmem:[%s989] sm:$0xff]
        %v991 = vld [vmem:[%s989 + $0x8] sm:$0xff]
        %v992 = vld [vmem:[%s989 + $0x10] sm:$0xf]
        %s993 = scalar_lea.vmem %s2, 72
        %v994 = vld [vmem:[%s993] sm:$0xff]
        %v995 = vld [vmem:[%s993 + $0x8] sm:$0xff]
        %v996 = vld [vmem:[%s993 + $0x10] sm:$0xf]
        %998 = vset.pattern.permute.xlu0 0
        %999 = vperm.xlu0 %998, %v994
        %v1000 = vpop.permute.xlu0 %999
        %1003 = vset.pattern.permute.xlu0 0
        %1004 = vperm.xlu0 %1003, %v995
        %v1005 = vpop.permute.xlu0 %1004
        %1008 = vset.pattern.permute.xlu0 0
        %1009 = vperm.xlu0 %1008, %v996
        %v1010 = vpop.permute.xlu0 %1009
        %v1013 = vsel %vm434, %v990, 0
        %v1016 = vsel %vm434, %v991, 0
        %v1019 = vsel %vm434, %v992, 0
        %v1022 = vsel %vm444, %v981, 0
        %v1025 = vsel %vm444, %v982, 0
        %v1028 = vsel %vm444, %v983, 0
        %v1031 = vsel %vm444, %v984, 0
        %v1034 = vsel %vm444, %v985, 0
        %v1037 = vsel %vm444, %v986, 0
        %v1040 = vsel %vm444, %v987, 0
        %v1043 = vsel %vm444, %v988, 0
        %1045 = vmatpush.msra.mxu0 0.0
        %1046 = vmatpush.msra.mxu0 0.0
        %1047 = vmatpush.msra.mxu0 0.0
        %1048 = vmatpush.msra.mxu0 0.0
        %1049 = vmatpush.msra.mxu0 0.0
        %1050 = vmatpush.msra.mxu0 0.0
        %1051 = vmatpush.msra.mxu0 0.0
        %1052 = vmatpush.msra.mxu0 0.0
        %1053 = vmatpush.msra.mxu0 0.0
        %1054 = vmatpush.msra.mxu0 0.0
        %1055 = vmatpush.msra.mxu0 0.0
        %1056 = vmatpush.msra.mxu0 0.0
        %1057 = vmatpush.msra.mxu0 0.0
        %1058 = vmatpush.msra.mxu0 %v1022
        %1059 = vmatpush.msra.mxu0 %v973
        %1060 = vmatpush.msra.mxu0 %v965
        %1061 = vmatmul.f32.gmra.mxu0 %v1013
        %v1062 = vpop.f32.mrf.mxu0
        %v1063 = vadd.f32 %v1000, %v1062
        %1064 = vmatmul.f32.gmra.mxu0 %v1016
        %v1065 = vpop.f32.mrf.mxu0
        %v1066 = vadd.f32 %v1005, %v1065
        %1067 = vmatmul.f32.gmra.mxu0 %v1019
        %v1068 = vpop.f32.mrf.mxu0
        %v1069 = vadd.f32 %v1010, %v1068
        %1070 = vdwg.mxu0
        %1071 = vmatpush.msra.mxu0 0.0
        %1072 = vmatpush.msra.mxu0 0.0
        %1073 = vmatpush.msra.mxu0 0.0
        %1074 = vmatpush.msra.mxu0 0.0
        %1075 = vmatpush.msra.mxu0 0.0
        %1076 = vmatpush.msra.mxu0 0.0
        %1077 = vmatpush.msra.mxu0 0.0
        %1078 = vmatpush.msra.mxu0 0.0
        %1079 = vmatpush.msra.mxu0 0.0
        %1080 = vmatpush.msra.mxu0 0.0
        %1081 = vmatpush.msra.mxu0 0.0
        %1082 = vmatpush.msra.mxu0 0.0
        %1083 = vmatpush.msra.mxu0 0.0
        %1084 = vmatpush.msra.mxu0 %v1025
        %1085 = vmatpush.msra.mxu0 %v974
        %1086 = vmatpush.msra.mxu0 %v966
        %1087 = vmatmul.f32.gmra.mxu0 %v1013
        %v1088 = vpop.f32.mrf.mxu0
        %v1089 = vadd.f32 %v1000, %v1088
        %1090 = vmatmul.f32.gmra.mxu0 %v1016
        %v1091 = vpop.f32.mrf.mxu0
        %v1092 = vadd.f32 %v1005, %v1091
        %1093 = vmatmul.f32.gmra.mxu0 %v1019
        %v1094 = vpop.f32.mrf.mxu0
        %v1095 = vadd.f32 %v1010, %v1094
        %1096 = vdwg.mxu0
        %1097 = vmatpush.msra.mxu0 0.0
        %1098 = vmatpush.msra.mxu0 0.0
        %1099 = vmatpush.msra.mxu0 0.0
        %1100 = vmatpush.msra.mxu0 0.0
        %1101 = vmatpush.msra.mxu0 0.0
        %1102 = vmatpush.msra.mxu0 0.0
        %1103 = vmatpush.msra.mxu0 0.0
        %1104 = vmatpush.msra.mxu0 0.0
        %1105 = vmatpush.msra.mxu0 0.0
        %1106 = vmatpush.msra.mxu0 0.0
        %1107 = vmatpush.msra.mxu0 0.0
        %1108 = vmatpush.msra.mxu0 0.0
        %1109 = vmatpush.msra.mxu0 0.0
        %1110 = vmatpush.msra.mxu0 %v1028
        %1111 = vmatpush.msra.mxu0 %v975
        %1112 = vmatpush.msra.mxu0 %v967
        %1113 = vmatmul.f32.gmra.mxu0 %v1013
        %v1114 = vpop.f32.mrf.mxu0
        %v1115 = vadd.f32 %v1000, %v1114
        %1116 = vmatmul.f32.gmra.mxu0 %v1016
        %v1117 = vpop.f32.mrf.mxu0
        %v1118 = vadd.f32 %v1005, %v1117
        %1119 = vmatmul.f32.gmra.mxu0 %v1019
        %v1120 = vpop.f32.mrf.mxu0
        %v1121 = vadd.f32 %v1010, %v1120
        %1122 = vdwg.mxu0
        %1123 = vmatpush.msra.mxu0 0.0
        %1124 = vmatpush.msra.mxu0 0.0
        %1125 = vmatpush.msra.mxu0 0.0
        %1126 = vmatpush.msra.mxu0 0.0
        %1127 = vmatpush.msra.mxu0 0.0
        %1128 = vmatpush.msra.mxu0 0.0
        %1129 = vmatpush.msra.mxu0 0.0
        %1130 = vmatpush.msra.mxu0 0.0
        %1131 = vmatpush.msra.mxu0 0.0
        %1132 = vmatpush.msra.mxu0 0.0
        %1133 = vmatpush.msra.mxu0 0.0
        %1134 = vmatpush.msra.mxu0 0.0
        %1135 = vmatpush.msra.mxu0 0.0
        %1136 = vmatpush.msra.mxu0 %v1031
        %1137 = vmatpush.msra.mxu0 %v976
        %1138 = vmatpush.msra.mxu0 %v968
        %1139 = vmatmul.f32.gmra.mxu0 %v1013
        %v1140 = vpop.f32.mrf.mxu0
        %v1141 = vadd.f32 %v1000, %v1140
        %1142 = vmatmul.f32.gmra.mxu0 %v1016
        %v1143 = vpop.f32.mrf.mxu0
        %v1144 = vadd.f32 %v1005, %v1143
        %1145 = vmatmul.f32.gmra.mxu0 %v1019
        %v1146 = vpop.f32.mrf.mxu0
        %v1147 = vadd.f32 %v1010, %v1146
        %1148 = vdwg.mxu0
        %1149 = vmatpush.msra.mxu0 0.0
        %1150 = vmatpush.msra.mxu0 0.0
        %1151 = vmatpush.msra.mxu0 0.0
        %1152 = vmatpush.msra.mxu0 0.0
        %1153 = vmatpush.msra.mxu0 0.0
        %1154 = vmatpush.msra.mxu0 0.0
        %1155 = vmatpush.msra.mxu0 0.0
        %1156 = vmatpush.msra.mxu0 0.0
        %1157 = vmatpush.msra.mxu0 0.0
        %1158 = vmatpush.msra.mxu0 0.0
        %1159 = vmatpush.msra.mxu0 0.0
        %1160 = vmatpush.msra.mxu0 0.0
        %1161 = vmatpush.msra.mxu0 0.0
        %1162 = vmatpush.msra.mxu0 %v1034
        %1163 = vmatpush.msra.mxu0 %v977
        %1164 = vmatpush.msra.mxu0 %v969
        %1165 = vmatmul.f32.gmra.mxu0 %v1013
        %v1166 = vpop.f32.mrf.mxu0
        %v1167 = vadd.f32 %v1000, %v1166
        %1168 = vmatmul.f32.gmra.mxu0 %v1016
        %v1169 = vpop.f32.mrf.mxu0
        %v1170 = vadd.f32 %v1005, %v1169
        %1171 = vmatmul.f32.gmra.mxu0 %v1019
        %v1172 = vpop.f32.mrf.mxu0
        %v1173 = vadd.f32 %v1010, %v1172
        %1174 = vdwg.mxu0
        %1175 = vmatpush.msra.mxu0 0.0
        %1176 = vmatpush.msra.mxu0 0.0
        %1177 = vmatpush.msra.mxu0 0.0
        %1178 = vmatpush.msra.mxu0 0.0
        %1179 = vmatpush.msra.mxu0 0.0
        %1180 = vmatpush.msra.mxu0 0.0
        %1181 = vmatpush.msra.mxu0 0.0
        %1182 = vmatpush.msra.mxu0 0.0
        %1183 = vmatpush.msra.mxu0 0.0
        %1184 = vmatpush.msra.mxu0 0.0
        %1185 = vmatpush.msra.mxu0 0.0
        %1186 = vmatpush.msra.mxu0 0.0
        %1187 = vmatpush.msra.mxu0 0.0
        %1188 = vmatpush.msra.mxu0 %v1037
        %1189 = vmatpush.msra.mxu0 %v978
        %1190 = vmatpush.msra.mxu0 %v970
        %1191 = vmatmul.f32.gmra.mxu0 %v1013
        %v1192 = vpop.f32.mrf.mxu0
        %v1193 = vadd.f32 %v1000, %v1192
        %1194 = vmatmul.f32.gmra.mxu0 %v1016
        %v1195 = vpop.f32.mrf.mxu0
        %v1196 = vadd.f32 %v1005, %v1195
        %1197 = vmatmul.f32.gmra.mxu0 %v1019
        %v1198 = vpop.f32.mrf.mxu0
        %v1199 = vadd.f32 %v1010, %v1198
        %1200 = vdwg.mxu0
        %1201 = vmatpush.msra.mxu0 0.0
        %1202 = vmatpush.msra.mxu0 0.0
        %1203 = vmatpush.msra.mxu0 0.0
        %1204 = vmatpush.msra.mxu0 0.0
        %1205 = vmatpush.msra.mxu0 0.0
        %1206 = vmatpush.msra.mxu0 0.0
        %1207 = vmatpush.msra.mxu0 0.0
        %1208 = vmatpush.msra.mxu0 0.0
        %1209 = vmatpush.msra.mxu0 0.0
        %1210 = vmatpush.msra.mxu0 0.0
        %1211 = vmatpush.msra.mxu0 0.0
        %1212 = vmatpush.msra.mxu0 0.0
        %1213 = vmatpush.msra.mxu0 0.0
        %1214 = vmatpush.msra.mxu0 %v1040
        %1215 = vmatpush.msra.mxu0 %v979
        %1216 = vmatpush.msra.mxu0 %v971
        %1217 = vmatmul.f32.gmra.mxu0 %v1013
        %v1218 = vpop.f32.mrf.mxu0
        %v1219 = vadd.f32 %v1000, %v1218
        %1220 = vmatmul.f32.gmra.mxu0 %v1016
        %v1221 = vpop.f32.mrf.mxu0
        %v1222 = vadd.f32 %v1005, %v1221
        %1223 = vmatmul.f32.gmra.mxu0 %v1019
        %v1224 = vpop.f32.mrf.mxu0
        %v1225 = vadd.f32 %v1010, %v1224
        %1226 = vdwg.mxu0
        %1227 = vmatpush.msra.mxu0 0.0
        %1228 = vmatpush.msra.mxu0 0.0
        %1229 = vmatpush.msra.mxu0 0.0
        %1230 = vmatpush.msra.mxu0 0.0
        %1231 = vmatpush.msra.mxu0 0.0
        %1232 = vmatpush.msra.mxu0 0.0
        %1233 = vmatpush.msra.mxu0 0.0
        %1234 = vmatpush.msra.mxu0 0.0
        %1235 = vmatpush.msra.mxu0 0.0
        %1236 = vmatpush.msra.mxu0 0.0
        %1237 = vmatpush.msra.mxu0 0.0
        %1238 = vmatpush.msra.mxu0 0.0
        %1239 = vmatpush.msra.mxu0 0.0
        %1240 = vmatpush.msra.mxu0 %v1043
        %1241 = vmatpush.msra.mxu0 %v980
        %1242 = vmatpush.msra.mxu0 %v972
        %1243 = vmatmul.f32.gmra.mxu0 %v1013
        %v1244 = vpop.f32.mrf.mxu0
        %v1245 = vadd.f32 %v1000, %v1244
        %1246 = vmatmul.f32.gmra.mxu0 %v1016
        %v1247 = vpop.f32.mrf.mxu0
        %v1248 = vadd.f32 %v1005, %v1247
        %1249 = vmatmul.f32.gmra.mxu0 %v1019
        %v1250 = vpop.f32.mrf.mxu0
        %v1251 = vadd.f32 %v1010, %v1250
        %1252 = vdwg.mxu0
        %v1253 = vtanh.pop %v1063
        %v1254 = vtanh.pop %v1089
        %v1255 = vtanh.pop %v1115
        %v1256 = vtanh.pop %v1141
        %v1257 = vtanh.pop %v1167
        %v1258 = vtanh.pop %v1193
        %v1259 = vtanh.pop %v1219
        %v1260 = vtanh.pop %v1245
        %v1261 = vtanh.pop %v1066
        %v1262 = vtanh.pop %v1092
        %v1263 = vtanh.pop %v1118
        %v1264 = vtanh.pop %v1144
        %v1265 = vtanh.pop %v1170
        %v1266 = vtanh.pop %v1196
        %v1267 = vtanh.pop %v1222
        %v1268 = vtanh.pop %v1248
        %v1269 = vtanh.pop %v1069
        %v1270 = vtanh.pop %v1095
        %v1271 = vtanh.pop %v1121
        %v1272 = vtanh.pop %v1147
        %v1273 = vtanh.pop %v1173
        %v1274 = vtanh.pop %v1199
        %v1275 = vtanh.pop %v1225
        %v1276 = vtanh.pop %v1251
        %s1277 = scalar_lea.vmem %s1, 96
        %v1278 = vld [vmem:[%s1277] sm:$0xff]
        %v1279 = vld [vmem:[%s1277 + $0x8] sm:$0xff]
        %v1280 = vld [vmem:[%s1277 + $0x10] sm:$0xf]
        %s1281 = scalar_lea.vmem %s2, 96
        %v1282 = vld [vmem:[%s1281] sm:$0xff]
        %v1283 = vld [vmem:[%s1281 + $0x8] sm:$0xff]
        %v1284 = vld [vmem:[%s1281 + $0x10] sm:$0xf]
        %1286 = vset.pattern.permute.xlu0 0
        %1287 = vperm.xlu0 %1286, %v1282
        %v1288 = vpop.permute.xlu0 %1287
        %1291 = vset.pattern.permute.xlu0 0
        %1292 = vperm.xlu0 %1291, %v1283
        %v1293 = vpop.permute.xlu0 %1292
        %1296 = vset.pattern.permute.xlu0 0
        %1297 = vperm.xlu0 %1296, %v1284
        %v1298 = vpop.permute.xlu0 %1297
        %v1301 = vsel %vm434, %v1278, 0
        %v1304 = vsel %vm434, %v1279, 0
        %v1307 = vsel %vm434, %v1280, 0
        %v1310 = vsel %vm444, %v1269, 0
        %v1313 = vsel %vm444, %v1270, 0
        %v1316 = vsel %vm444, %v1271, 0
        %v1319 = vsel %vm444, %v1272, 0
        %v1322 = vsel %vm444, %v1273, 0
        %v1325 = vsel %vm444, %v1274, 0
        %v1328 = vsel %vm444, %v1275, 0
        %v1331 = vsel %vm444, %v1276, 0
        %1333 = vmatpush.msra.mxu0 0.0
        %1334 = vmatpush.msra.mxu0 0.0
        %1335 = vmatpush.msra.mxu0 0.0
        %1336 = vmatpush.msra.mxu0 0.0
        %1337 = vmatpush.msra.mxu0 0.0
        %1338 = vmatpush.msra.mxu0 0.0
        %1339 = vmatpush.msra.mxu0 0.0
        %1340 = vmatpush.msra.mxu0 0.0
        %1341 = vmatpush.msra.mxu0 0.0
        %1342 = vmatpush.msra.mxu0 0.0
        %1343 = vmatpush.msra.mxu0 0.0
        %1344 = vmatpush.msra.mxu0 0.0
        %1345 = vmatpush.msra.mxu0 0.0
        %1346 = vmatpush.msra.mxu0 %v1310
        %1347 = vmatpush.msra.mxu0 %v1261
        %1348 = vmatpush.msra.mxu0 %v1253
        %1349 = vmatmul.f32.gmra.mxu0 %v1301
        %v1350 = vpop.f32.mrf.mxu0
        %v1351 = vadd.f32 %v1288, %v1350
        %1352 = vmatmul.f32.gmra.mxu0 %v1304
        %v1353 = vpop.f32.mrf.mxu0
        %v1354 = vadd.f32 %v1293, %v1353
        %1355 = vmatmul.f32.gmra.mxu0 %v1307
        %v1356 = vpop.f32.mrf.mxu0
        %v1357 = vadd.f32 %v1298, %v1356
        %1358 = vdwg.mxu0
        %1359 = vmatpush.msra.mxu0 0.0
        %1360 = vmatpush.msra.mxu0 0.0
        %1361 = vmatpush.msra.mxu0 0.0
        %1362 = vmatpush.msra.mxu0 0.0
        %1363 = vmatpush.msra.mxu0 0.0
        %1364 = vmatpush.msra.mxu0 0.0
        %1365 = vmatpush.msra.mxu0 0.0
        %1366 = vmatpush.msra.mxu0 0.0
        %1367 = vmatpush.msra.mxu0 0.0
        %1368 = vmatpush.msra.mxu0 0.0
        %1369 = vmatpush.msra.mxu0 0.0
        %1370 = vmatpush.msra.mxu0 0.0
        %1371 = vmatpush.msra.mxu0 0.0
        %1372 = vmatpush.msra.mxu0 %v1313
        %1373 = vmatpush.msra.mxu0 %v1262
        %1374 = vmatpush.msra.mxu0 %v1254
        %1375 = vmatmul.f32.gmra.mxu0 %v1301
        %v1376 = vpop.f32.mrf.mxu0
        %v1377 = vadd.f32 %v1288, %v1376
        %1378 = vmatmul.f32.gmra.mxu0 %v1304
        %v1379 = vpop.f32.mrf.mxu0
        %v1380 = vadd.f32 %v1293, %v1379
        %1381 = vmatmul.f32.gmra.mxu0 %v1307
        %v1382 = vpop.f32.mrf.mxu0
        %v1383 = vadd.f32 %v1298, %v1382
        %1384 = vdwg.mxu0
        %1385 = vmatpush.msra.mxu0 0.0
        %1386 = vmatpush.msra.mxu0 0.0
        %1387 = vmatpush.msra.mxu0 0.0
        %1388 = vmatpush.msra.mxu0 0.0
        %1389 = vmatpush.msra.mxu0 0.0
        %1390 = vmatpush.msra.mxu0 0.0
        %1391 = vmatpush.msra.mxu0 0.0
        %1392 = vmatpush.msra.mxu0 0.0
        %1393 = vmatpush.msra.mxu0 0.0
        %1394 = vmatpush.msra.mxu0 0.0
        %1395 = vmatpush.msra.mxu0 0.0
        %1396 = vmatpush.msra.mxu0 0.0
        %1397 = vmatpush.msra.mxu0 0.0
        %1398 = vmatpush.msra.mxu0 %v1316
        %1399 = vmatpush.msra.mxu0 %v1263
        %1400 = vmatpush.msra.mxu0 %v1255
        %1401 = vmatmul.f32.gmra.mxu0 %v1301
        %v1402 = vpop.f32.mrf.mxu0
        %v1403 = vadd.f32 %v1288, %v1402
        %1404 = vmatmul.f32.gmra.mxu0 %v1304
        %v1405 = vpop.f32.mrf.mxu0
        %v1406 = vadd.f32 %v1293, %v1405
        %1407 = vmatmul.f32.gmra.mxu0 %v1307
        %v1408 = vpop.f32.mrf.mxu0
        %v1409 = vadd.f32 %v1298, %v1408
        %1410 = vdwg.mxu0
        %1411 = vmatpush.msra.mxu0 0.0
        %1412 = vmatpush.msra.mxu0 0.0
        %1413 = vmatpush.msra.mxu0 0.0
        %1414 = vmatpush.msra.mxu0 0.0
        %1415 = vmatpush.msra.mxu0 0.0
        %1416 = vmatpush.msra.mxu0 0.0
        %1417 = vmatpush.msra.mxu0 0.0
        %1418 = vmatpush.msra.mxu0 0.0
        %1419 = vmatpush.msra.mxu0 0.0
        %1420 = vmatpush.msra.mxu0 0.0
        %1421 = vmatpush.msra.mxu0 0.0
        %1422 = vmatpush.msra.mxu0 0.0
        %1423 = vmatpush.msra.mxu0 0.0
        %1424 = vmatpush.msra.mxu0 %v1319
        %1425 = vmatpush.msra.mxu0 %v1264
        %1426 = vmatpush.msra.mxu0 %v1256
        %1427 = vmatmul.f32.gmra.mxu0 %v1301
        %v1428 = vpop.f32.mrf.mxu0
        %v1429 = vadd.f32 %v1288, %v1428
        %1430 = vmatmul.f32.gmra.mxu0 %v1304
        %v1431 = vpop.f32.mrf.mxu0
        %v1432 = vadd.f32 %v1293, %v1431
        %1433 = vmatmul.f32.gmra.mxu0 %v1307
        %v1434 = vpop.f32.mrf.mxu0
        %v1435 = vadd.f32 %v1298, %v1434
        %1436 = vdwg.mxu0
        %1437 = vmatpush.msra.mxu0 0.0
        %1438 = vmatpush.msra.mxu0 0.0
        %1439 = vmatpush.msra.mxu0 0.0
        %1440 = vmatpush.msra.mxu0 0.0
        %1441 = vmatpush.msra.mxu0 0.0
        %1442 = vmatpush.msra.mxu0 0.0
        %1443 = vmatpush.msra.mxu0 0.0
        %1444 = vmatpush.msra.mxu0 0.0
        %1445 = vmatpush.msra.mxu0 0.0
        %1446 = vmatpush.msra.mxu0 0.0
        %1447 = vmatpush.msra.mxu0 0.0
        %1448 = vmatpush.msra.mxu0 0.0
        %1449 = vmatpush.msra.mxu0 0.0
        %1450 = vmatpush.msra.mxu0 %v1322
        %1451 = vmatpush.msra.mxu0 %v1265
        %1452 = vmatpush.msra.mxu0 %v1257
        %1453 = vmatmul.f32.gmra.mxu0 %v1301
        %v1454 = vpop.f32.mrf.mxu0
        %v1455 = vadd.f32 %v1288, %v1454
        %1456 = vmatmul.f32.gmra.mxu0 %v1304
        %v1457 = vpop.f32.mrf.mxu0
        %v1458 = vadd.f32 %v1293, %v1457
        %1459 = vmatmul.f32.gmra.mxu0 %v1307
        %v1460 = vpop.f32.mrf.mxu0
        %v1461 = vadd.f32 %v1298, %v1460
        %1462 = vdwg.mxu0
        %1463 = vmatpush.msra.mxu0 0.0
        %1464 = vmatpush.msra.mxu0 0.0
        %1465 = vmatpush.msra.mxu0 0.0
        %1466 = vmatpush.msra.mxu0 0.0
        %1467 = vmatpush.msra.mxu0 0.0
        %1468 = vmatpush.msra.mxu0 0.0
        %1469 = vmatpush.msra.mxu0 0.0
        %1470 = vmatpush.msra.mxu0 0.0
        %1471 = vmatpush.msra.mxu0 0.0
        %1472 = vmatpush.msra.mxu0 0.0
        %1473 = vmatpush.msra.mxu0 0.0
        %1474 = vmatpush.msra.mxu0 0.0
        %1475 = vmatpush.msra.mxu0 0.0
        %1476 = vmatpush.msra.mxu0 %v1325
        %1477 = vmatpush.msra.mxu0 %v1266
        %1478 = vmatpush.msra.mxu0 %v1258
        %1479 = vmatmul.f32.gmra.mxu0 %v1301
        %v1480 = vpop.f32.mrf.mxu0
        %v1481 = vadd.f32 %v1288, %v1480
        %1482 = vmatmul.f32.gmra.mxu0 %v1304
        %v1483 = vpop.f32.mrf.mxu0
        %v1484 = vadd.f32 %v1293, %v1483
        %1485 = vmatmul.f32.gmra.mxu0 %v1307
        %v1486 = vpop.f32.mrf.mxu0
        %v1487 = vadd.f32 %v1298, %v1486
        %1488 = vdwg.mxu0
        %1489 = vmatpush.msra.mxu0 0.0
        %1490 = vmatpush.msra.mxu0 0.0
        %1491 = vmatpush.msra.mxu0 0.0
        %1492 = vmatpush.msra.mxu0 0.0
        %1493 = vmatpush.msra.mxu0 0.0
        %1494 = vmatpush.msra.mxu0 0.0
        %1495 = vmatpush.msra.mxu0 0.0
        %1496 = vmatpush.msra.mxu0 0.0
        %1497 = vmatpush.msra.mxu0 0.0
        %1498 = vmatpush.msra.mxu0 0.0
        %1499 = vmatpush.msra.mxu0 0.0
        %1500 = vmatpush.msra.mxu0 0.0
        %1501 = vmatpush.msra.mxu0 0.0
        %1502 = vmatpush.msra.mxu0 %v1328
        %1503 = vmatpush.msra.mxu0 %v1267
        %1504 = vmatpush.msra.mxu0 %v1259
        %1505 = vmatmul.f32.gmra.mxu0 %v1301
        %v1506 = vpop.f32.mrf.mxu0
        %v1507 = vadd.f32 %v1288, %v1506
        %1508 = vmatmul.f32.gmra.mxu0 %v1304
        %v1509 = vpop.f32.mrf.mxu0
        %v1510 = vadd.f32 %v1293, %v1509
        %1511 = vmatmul.f32.gmra.mxu0 %v1307
        %v1512 = vpop.f32.mrf.mxu0
        %v1513 = vadd.f32 %v1298, %v1512
        %1514 = vdwg.mxu0
        %1515 = vmatpush.msra.mxu0 0.0
        %1516 = vmatpush.msra.mxu0 0.0
        %1517 = vmatpush.msra.mxu0 0.0
        %1518 = vmatpush.msra.mxu0 0.0
        %1519 = vmatpush.msra.mxu0 0.0
        %1520 = vmatpush.msra.mxu0 0.0
        %1521 = vmatpush.msra.mxu0 0.0
        %1522 = vmatpush.msra.mxu0 0.0
        %1523 = vmatpush.msra.mxu0 0.0
        %1524 = vmatpush.msra.mxu0 0.0
        %1525 = vmatpush.msra.mxu0 0.0
        %1526 = vmatpush.msra.mxu0 0.0
        %1527 = vmatpush.msra.mxu0 0.0
        %1528 = vmatpush.msra.mxu0 %v1331
        %1529 = vmatpush.msra.mxu0 %v1268
        %1530 = vmatpush.msra.mxu0 %v1260
        %1531 = vmatmul.f32.gmra.mxu0 %v1301
        %v1532 = vpop.f32.mrf.mxu0
        %v1533 = vadd.f32 %v1288, %v1532
        %1534 = vmatmul.f32.gmra.mxu0 %v1304
        %v1535 = vpop.f32.mrf.mxu0
        %v1536 = vadd.f32 %v1293, %v1535
        %1537 = vmatmul.f32.gmra.mxu0 %v1307
        %v1538 = vpop.f32.mrf.mxu0
        %v1539 = vadd.f32 %v1298, %v1538
        %1540 = vdwg.mxu0
        %v1541 = vtanh.pop %v1351
        %v1542 = vtanh.pop %v1377
        %v1543 = vtanh.pop %v1403
        %v1544 = vtanh.pop %v1429
        %v1545 = vtanh.pop %v1455
        %v1546 = vtanh.pop %v1481
        %v1547 = vtanh.pop %v1507
        %v1548 = vtanh.pop %v1533
        %v1549 = vtanh.pop %v1354
        %v1550 = vtanh.pop %v1380
        %v1551 = vtanh.pop %v1406
        %v1552 = vtanh.pop %v1432
        %v1553 = vtanh.pop %v1458
        %v1554 = vtanh.pop %v1484
        %v1555 = vtanh.pop %v1510
        %v1556 = vtanh.pop %v1536
        %v1557 = vtanh.pop %v1357
        %v1558 = vtanh.pop %v1383
        %v1559 = vtanh.pop %v1409
        %v1560 = vtanh.pop %v1435
        %v1561 = vtanh.pop %v1461
        %v1562 = vtanh.pop %v1487
        %v1563 = vtanh.pop %v1513
        %v1564 = vtanh.pop %v1539
        %s1565 = scalar_lea.vmem %s1, 120
        %v1566 = vld [vmem:[%s1565] sm:$0xff]
        %v1567 = vld [vmem:[%s1565 + $0x8] sm:$0xff]
        %v1568 = vld [vmem:[%s1565 + $0x10] sm:$0xf]
        %s1569 = scalar_lea.vmem %s2, 120
        %v1570 = vld [vmem:[%s1569] sm:$0xff]
        %v1571 = vld [vmem:[%s1569 + $0x8] sm:$0xff]
        %v1572 = vld [vmem:[%s1569 + $0x10] sm:$0xf]
        %1574 = vset.pattern.permute.xlu0 0
        %1575 = vperm.xlu0 %1574, %v1570
        %v1576 = vpop.permute.xlu0 %1575
        %1579 = vset.pattern.permute.xlu0 0
        %1580 = vperm.xlu0 %1579, %v1571
        %v1581 = vpop.permute.xlu0 %1580
        %1584 = vset.pattern.permute.xlu0 0
        %1585 = vperm.xlu0 %1584, %v1572
        %v1586 = vpop.permute.xlu0 %1585
        %v1589 = vsel %vm434, %v1566, 0
        %v1592 = vsel %vm434, %v1567, 0
        %v1595 = vsel %vm434, %v1568, 0
        %v1598 = vsel %vm444, %v1557, 0
        %v1601 = vsel %vm444, %v1558, 0
        %v1604 = vsel %vm444, %v1559, 0
        %v1607 = vsel %vm444, %v1560, 0
        %v1610 = vsel %vm444, %v1561, 0
        %v1613 = vsel %vm444, %v1562, 0
        %v1616 = vsel %vm444, %v1563, 0
        %v1619 = vsel %vm444, %v1564, 0
        %1621 = vmatpush.msra.mxu0 0.0
        %1622 = vmatpush.msra.mxu0 0.0
        %1623 = vmatpush.msra.mxu0 0.0
        %1624 = vmatpush.msra.mxu0 0.0
        %1625 = vmatpush.msra.mxu0 0.0
        %1626 = vmatpush.msra.mxu0 0.0
        %1627 = vmatpush.msra.mxu0 0.0
        %1628 = vmatpush.msra.mxu0 0.0
        %1629 = vmatpush.msra.mxu0 0.0
        %1630 = vmatpush.msra.mxu0 0.0
        %1631 = vmatpush.msra.mxu0 0.0
        %1632 = vmatpush.msra.mxu0 0.0
        %1633 = vmatpush.msra.mxu0 0.0
        %1634 = vmatpush.msra.mxu0 %v1598
        %1635 = vmatpush.msra.mxu0 %v1549
        %1636 = vmatpush.msra.mxu0 %v1541
        %1637 = vmatmul.f32.gmra.mxu0 %v1589
        %v1638 = vpop.f32.mrf.mxu0
        %v1639 = vadd.f32 %v1576, %v1638
        %1640 = vmatmul.f32.gmra.mxu0 %v1592
        %v1641 = vpop.f32.mrf.mxu0
        %v1642 = vadd.f32 %v1581, %v1641
        %1643 = vmatmul.f32.gmra.mxu0 %v1595
        %v1644 = vpop.f32.mrf.mxu0
        %v1645 = vadd.f32 %v1586, %v1644
        %1646 = vdwg.mxu0
        %1647 = vmatpush.msra.mxu0 0.0
        %1648 = vmatpush.msra.mxu0 0.0
        %1649 = vmatpush.msra.mxu0 0.0
        %1650 = vmatpush.msra.mxu0 0.0
        %1651 = vmatpush.msra.mxu0 0.0
        %1652 = vmatpush.msra.mxu0 0.0
        %1653 = vmatpush.msra.mxu0 0.0
        %1654 = vmatpush.msra.mxu0 0.0
        %1655 = vmatpush.msra.mxu0 0.0
        %1656 = vmatpush.msra.mxu0 0.0
        %1657 = vmatpush.msra.mxu0 0.0
        %1658 = vmatpush.msra.mxu0 0.0
        %1659 = vmatpush.msra.mxu0 0.0
        %1660 = vmatpush.msra.mxu0 %v1601
        %1661 = vmatpush.msra.mxu0 %v1550
        %1662 = vmatpush.msra.mxu0 %v1542
        %1663 = vmatmul.f32.gmra.mxu0 %v1589
        %v1664 = vpop.f32.mrf.mxu0
        %v1665 = vadd.f32 %v1576, %v1664
        %1666 = vmatmul.f32.gmra.mxu0 %v1592
        %v1667 = vpop.f32.mrf.mxu0
        %v1668 = vadd.f32 %v1581, %v1667
        %1669 = vmatmul.f32.gmra.mxu0 %v1595
        %v1670 = vpop.f32.mrf.mxu0
        %v1671 = vadd.f32 %v1586, %v1670
        %1672 = vdwg.mxu0
        %1673 = vmatpush.msra.mxu0 0.0
        %1674 = vmatpush.msra.mxu0 0.0
        %1675 = vmatpush.msra.mxu0 0.0
        %1676 = vmatpush.msra.mxu0 0.0
        %1677 = vmatpush.msra.mxu0 0.0
        %1678 = vmatpush.msra.mxu0 0.0
        %1679 = vmatpush.msra.mxu0 0.0
        %1680 = vmatpush.msra.mxu0 0.0
        %1681 = vmatpush.msra.mxu0 0.0
        %1682 = vmatpush.msra.mxu0 0.0
        %1683 = vmatpush.msra.mxu0 0.0
        %1684 = vmatpush.msra.mxu0 0.0
        %1685 = vmatpush.msra.mxu0 0.0
        %1686 = vmatpush.msra.mxu0 %v1604
        %1687 = vmatpush.msra.mxu0 %v1551
        %1688 = vmatpush.msra.mxu0 %v1543
        %1689 = vmatmul.f32.gmra.mxu0 %v1589
        %v1690 = vpop.f32.mrf.mxu0
        %v1691 = vadd.f32 %v1576, %v1690
        %1692 = vmatmul.f32.gmra.mxu0 %v1592
        %v1693 = vpop.f32.mrf.mxu0
        %v1694 = vadd.f32 %v1581, %v1693
        %1695 = vmatmul.f32.gmra.mxu0 %v1595
        %v1696 = vpop.f32.mrf.mxu0
        %v1697 = vadd.f32 %v1586, %v1696
        %1698 = vdwg.mxu0
        %1699 = vmatpush.msra.mxu0 0.0
        %1700 = vmatpush.msra.mxu0 0.0
        %1701 = vmatpush.msra.mxu0 0.0
        %1702 = vmatpush.msra.mxu0 0.0
        %1703 = vmatpush.msra.mxu0 0.0
        %1704 = vmatpush.msra.mxu0 0.0
        %1705 = vmatpush.msra.mxu0 0.0
        %1706 = vmatpush.msra.mxu0 0.0
        %1707 = vmatpush.msra.mxu0 0.0
        %1708 = vmatpush.msra.mxu0 0.0
        %1709 = vmatpush.msra.mxu0 0.0
        %1710 = vmatpush.msra.mxu0 0.0
        %1711 = vmatpush.msra.mxu0 0.0
        %1712 = vmatpush.msra.mxu0 %v1607
        %1713 = vmatpush.msra.mxu0 %v1552
        %1714 = vmatpush.msra.mxu0 %v1544
        %1715 = vmatmul.f32.gmra.mxu0 %v1589
        %v1716 = vpop.f32.mrf.mxu0
        %v1717 = vadd.f32 %v1576, %v1716
        %1718 = vmatmul.f32.gmra.mxu0 %v1592
        %v1719 = vpop.f32.mrf.mxu0
        %v1720 = vadd.f32 %v1581, %v1719
        %1721 = vmatmul.f32.gmra.mxu0 %v1595
        %v1722 = vpop.f32.mrf.mxu0
        %v1723 = vadd.f32 %v1586, %v1722
        %1724 = vdwg.mxu0
        %1725 = vmatpush.msra.mxu0 0.0
        %1726 = vmatpush.msra.mxu0 0.0
        %1727 = vmatpush.msra.mxu0 0.0
        %1728 = vmatpush.msra.mxu0 0.0
        %1729 = vmatpush.msra.mxu0 0.0
        %1730 = vmatpush.msra.mxu0 0.0
        %1731 = vmatpush.msra.mxu0 0.0
        %1732 = vmatpush.msra.mxu0 0.0
        %1733 = vmatpush.msra.mxu0 0.0
        %1734 = vmatpush.msra.mxu0 0.0
        %1735 = vmatpush.msra.mxu0 0.0
        %1736 = vmatpush.msra.mxu0 0.0
        %1737 = vmatpush.msra.mxu0 0.0
        %1738 = vmatpush.msra.mxu0 %v1610
        %1739 = vmatpush.msra.mxu0 %v1553
        %1740 = vmatpush.msra.mxu0 %v1545
        %1741 = vmatmul.f32.gmra.mxu0 %v1589
        %v1742 = vpop.f32.mrf.mxu0
        %v1743 = vadd.f32 %v1576, %v1742
        %1744 = vmatmul.f32.gmra.mxu0 %v1592
        %v1745 = vpop.f32.mrf.mxu0
        %v1746 = vadd.f32 %v1581, %v1745
        %1747 = vmatmul.f32.gmra.mxu0 %v1595
        %v1748 = vpop.f32.mrf.mxu0
        %v1749 = vadd.f32 %v1586, %v1748
        %1750 = vdwg.mxu0
        %1751 = vmatpush.msra.mxu0 0.0
        %1752 = vmatpush.msra.mxu0 0.0
        %1753 = vmatpush.msra.mxu0 0.0
        %1754 = vmatpush.msra.mxu0 0.0
        %1755 = vmatpush.msra.mxu0 0.0
        %1756 = vmatpush.msra.mxu0 0.0
        %1757 = vmatpush.msra.mxu0 0.0
        %1758 = vmatpush.msra.mxu0 0.0
        %1759 = vmatpush.msra.mxu0 0.0
        %1760 = vmatpush.msra.mxu0 0.0
        %1761 = vmatpush.msra.mxu0 0.0
        %1762 = vmatpush.msra.mxu0 0.0
        %1763 = vmatpush.msra.mxu0 0.0
        %1764 = vmatpush.msra.mxu0 %v1613
        %1765 = vmatpush.msra.mxu0 %v1554
        %1766 = vmatpush.msra.mxu0 %v1546
        %1767 = vmatmul.f32.gmra.mxu0 %v1589
        %v1768 = vpop.f32.mrf.mxu0
        %v1769 = vadd.f32 %v1576, %v1768
        %1770 = vmatmul.f32.gmra.mxu0 %v1592
        %v1771 = vpop.f32.mrf.mxu0
        %v1772 = vadd.f32 %v1581, %v1771
        %1773 = vmatmul.f32.gmra.mxu0 %v1595
        %v1774 = vpop.f32.mrf.mxu0
        %v1775 = vadd.f32 %v1586, %v1774
        %1776 = vdwg.mxu0
        %1777 = vmatpush.msra.mxu0 0.0
        %1778 = vmatpush.msra.mxu0 0.0
        %1779 = vmatpush.msra.mxu0 0.0
        %1780 = vmatpush.msra.mxu0 0.0
        %1781 = vmatpush.msra.mxu0 0.0
        %1782 = vmatpush.msra.mxu0 0.0
        %1783 = vmatpush.msra.mxu0 0.0
        %1784 = vmatpush.msra.mxu0 0.0
        %1785 = vmatpush.msra.mxu0 0.0
        %1786 = vmatpush.msra.mxu0 0.0
        %1787 = vmatpush.msra.mxu0 0.0
        %1788 = vmatpush.msra.mxu0 0.0
        %1789 = vmatpush.msra.mxu0 0.0
        %1790 = vmatpush.msra.mxu0 %v1616
        %1791 = vmatpush.msra.mxu0 %v1555
        %1792 = vmatpush.msra.mxu0 %v1547
        %1793 = vmatmul.f32.gmra.mxu0 %v1589
        %v1794 = vpop.f32.mrf.mxu0
        %v1795 = vadd.f32 %v1576, %v1794
        %1796 = vmatmul.f32.gmra.mxu0 %v1592
        %v1797 = vpop.f32.mrf.mxu0
        %v1798 = vadd.f32 %v1581, %v1797
        %1799 = vmatmul.f32.gmra.mxu0 %v1595
        %v1800 = vpop.f32.mrf.mxu0
        %v1801 = vadd.f32 %v1586, %v1800
        %1802 = vdwg.mxu0
        %1803 = vmatpush.msra.mxu0 0.0
        %1804 = vmatpush.msra.mxu0 0.0
        %1805 = vmatpush.msra.mxu0 0.0
        %1806 = vmatpush.msra.mxu0 0.0
        %1807 = vmatpush.msra.mxu0 0.0
        %1808 = vmatpush.msra.mxu0 0.0
        %1809 = vmatpush.msra.mxu0 0.0
        %1810 = vmatpush.msra.mxu0 0.0
        %1811 = vmatpush.msra.mxu0 0.0
        %1812 = vmatpush.msra.mxu0 0.0
        %1813 = vmatpush.msra.mxu0 0.0
        %1814 = vmatpush.msra.mxu0 0.0
        %1815 = vmatpush.msra.mxu0 0.0
        %1816 = vmatpush.msra.mxu0 %v1619
        %1817 = vmatpush.msra.mxu0 %v1556
        %1818 = vmatpush.msra.mxu0 %v1548
        %1819 = vmatmul.f32.gmra.mxu0 %v1589
        %v1820 = vpop.f32.mrf.mxu0
        %v1821 = vadd.f32 %v1576, %v1820
        %1822 = vmatmul.f32.gmra.mxu0 %v1592
        %v1823 = vpop.f32.mrf.mxu0
        %v1824 = vadd.f32 %v1581, %v1823
        %1825 = vmatmul.f32.gmra.mxu0 %v1595
        %v1826 = vpop.f32.mrf.mxu0
        %v1827 = vadd.f32 %v1586, %v1826
        %1828 = vdwg.mxu0
        %v1829 = vtanh.pop %v1639
        %v1830 = vtanh.pop %v1665
        %v1831 = vtanh.pop %v1691
        %v1832 = vtanh.pop %v1717
        %v1833 = vtanh.pop %v1743
        %v1834 = vtanh.pop %v1769
        %v1835 = vtanh.pop %v1795
        %v1836 = vtanh.pop %v1821
        %v1837 = vtanh.pop %v1642
        %v1838 = vtanh.pop %v1668
        %v1839 = vtanh.pop %v1694
        %v1840 = vtanh.pop %v1720
        %v1841 = vtanh.pop %v1746
        %v1842 = vtanh.pop %v1772
        %v1843 = vtanh.pop %v1798
        %v1844 = vtanh.pop %v1824
        %v1845 = vtanh.pop %v1645
        %v1846 = vtanh.pop %v1671
        %v1847 = vtanh.pop %v1697
        %v1848 = vtanh.pop %v1723
        %v1849 = vtanh.pop %v1749
        %v1850 = vtanh.pop %v1775
        %v1851 = vtanh.pop %v1801
        %v1852 = vtanh.pop %v1827
        %s1853 = scalar_lea.vmem %s1, 144
        %v1854 = vld [vmem:[%s1853] sm:$0xff]
        %v1855 = vld [vmem:[%s1853 + $0x8] sm:$0xff]
        %v1856 = vld [vmem:[%s1853 + $0x10] sm:$0xf]
        %s1857 = scalar_lea.vmem %s2, 144
        %v1858 = vld [vmem:[%s1857] sm:$0xff]
        %v1859 = vld [vmem:[%s1857 + $0x8] sm:$0xff]
        %v1860 = vld [vmem:[%s1857 + $0x10] sm:$0xf]
        %1862 = vset.pattern.permute.xlu0 0
        %1863 = vperm.xlu0 %1862, %v1858
        %v1864 = vpop.permute.xlu0 %1863
        %1867 = vset.pattern.permute.xlu0 0
        %1868 = vperm.xlu0 %1867, %v1859
        %v1869 = vpop.permute.xlu0 %1868
        %1872 = vset.pattern.permute.xlu0 0
        %1873 = vperm.xlu0 %1872, %v1860
        %v1874 = vpop.permute.xlu0 %1873
        %v1877 = vsel %vm434, %v1854, 0
        %v1880 = vsel %vm434, %v1855, 0
        %v1883 = vsel %vm434, %v1856, 0
        %v1886 = vsel %vm444, %v1845, 0
        %v1889 = vsel %vm444, %v1846, 0
        %v1892 = vsel %vm444, %v1847, 0
        %v1895 = vsel %vm444, %v1848, 0
        %v1898 = vsel %vm444, %v1849, 0
        %v1901 = vsel %vm444, %v1850, 0
        %v1904 = vsel %vm444, %v1851, 0
        %v1907 = vsel %vm444, %v1852, 0
        %1909 = vmatpush.msra.mxu0 0.0
        %1910 = vmatpush.msra.mxu0 0.0
        %1911 = vmatpush.msra.mxu0 0.0
        %1912 = vmatpush.msra.mxu0 0.0
        %1913 = vmatpush.msra.mxu0 0.0
        %1914 = vmatpush.msra.mxu0 0.0
        %1915 = vmatpush.msra.mxu0 0.0
        %1916 = vmatpush.msra.mxu0 0.0
        %1917 = vmatpush.msra.mxu0 0.0
        %1918 = vmatpush.msra.mxu0 0.0
        %1919 = vmatpush.msra.mxu0 0.0
        %1920 = vmatpush.msra.mxu0 0.0
        %1921 = vmatpush.msra.mxu0 0.0
        %1922 = vmatpush.msra.mxu0 %v1886
        %1923 = vmatpush.msra.mxu0 %v1837
        %1924 = vmatpush.msra.mxu0 %v1829
        %1925 = vmatmul.f32.gmra.mxu0 %v1877
        %v1926 = vpop.f32.mrf.mxu0
        %v1927 = vadd.f32 %v1864, %v1926
        %1928 = vmatmul.f32.gmra.mxu0 %v1880
        %v1929 = vpop.f32.mrf.mxu0
        %v1930 = vadd.f32 %v1869, %v1929
        %1931 = vmatmul.f32.gmra.mxu0 %v1883
        %v1932 = vpop.f32.mrf.mxu0
        %v1933 = vadd.f32 %v1874, %v1932
        %1934 = vdwg.mxu0
        %1935 = vmatpush.msra.mxu0 0.0
        %1936 = vmatpush.msra.mxu0 0.0
        %1937 = vmatpush.msra.mxu0 0.0
        %1938 = vmatpush.msra.mxu0 0.0
        %1939 = vmatpush.msra.mxu0 0.0
        %1940 = vmatpush.msra.mxu0 0.0
        %1941 = vmatpush.msra.mxu0 0.0
        %1942 = vmatpush.msra.mxu0 0.0
        %1943 = vmatpush.msra.mxu0 0.0
        %1944 = vmatpush.msra.mxu0 0.0
        %1945 = vmatpush.msra.mxu0 0.0
        %1946 = vmatpush.msra.mxu0 0.0
        %1947 = vmatpush.msra.mxu0 0.0
        %1948 = vmatpush.msra.mxu0 %v1889
        %1949 = vmatpush.msra.mxu0 %v1838
        %1950 = vmatpush.msra.mxu0 %v1830
        %1951 = vmatmul.f32.gmra.mxu0 %v1877
        %v1952 = vpop.f32.mrf.mxu0
        %v1953 = vadd.f32 %v1864, %v1952
        %1954 = vmatmul.f32.gmra.mxu0 %v1880
        %v1955 = vpop.f32.mrf.mxu0
        %v1956 = vadd.f32 %v1869, %v1955
        %1957 = vmatmul.f32.gmra.mxu0 %v1883
        %v1958 = vpop.f32.mrf.mxu0
        %v1959 = vadd.f32 %v1874, %v1958
        %1960 = vdwg.mxu0
        %1961 = vmatpush.msra.mxu0 0.0
        %1962 = vmatpush.msra.mxu0 0.0
        %1963 = vmatpush.msra.mxu0 0.0
        %1964 = vmatpush.msra.mxu0 0.0
        %1965 = vmatpush.msra.mxu0 0.0
        %1966 = vmatpush.msra.mxu0 0.0
        %1967 = vmatpush.msra.mxu0 0.0
        %1968 = vmatpush.msra.mxu0 0.0
        %1969 = vmatpush.msra.mxu0 0.0
        %1970 = vmatpush.msra.mxu0 0.0
        %1971 = vmatpush.msra.mxu0 0.0
        %1972 = vmatpush.msra.mxu0 0.0
        %1973 = vmatpush.msra.mxu0 0.0
        %1974 = vmatpush.msra.mxu0 %v1892
        %1975 = vmatpush.msra.mxu0 %v1839
        %1976 = vmatpush.msra.mxu0 %v1831
        %1977 = vmatmul.f32.gmra.mxu0 %v1877
        %v1978 = vpop.f32.mrf.mxu0
        %v1979 = vadd.f32 %v1864, %v1978
        %1980 = vmatmul.f32.gmra.mxu0 %v1880
        %v1981 = vpop.f32.mrf.mxu0
        %v1982 = vadd.f32 %v1869, %v1981
        %1983 = vmatmul.f32.gmra.mxu0 %v1883
        %v1984 = vpop.f32.mrf.mxu0
        %v1985 = vadd.f32 %v1874, %v1984
        %1986 = vdwg.mxu0
        %1987 = vmatpush.msra.mxu0 0.0
        %1988 = vmatpush.msra.mxu0 0.0
        %1989 = vmatpush.msra.mxu0 0.0
        %1990 = vmatpush.msra.mxu0 0.0
        %1991 = vmatpush.msra.mxu0 0.0
        %1992 = vmatpush.msra.mxu0 0.0
        %1993 = vmatpush.msra.mxu0 0.0
        %1994 = vmatpush.msra.mxu0 0.0
        %1995 = vmatpush.msra.mxu0 0.0
        %1996 = vmatpush.msra.mxu0 0.0
        %1997 = vmatpush.msra.mxu0 0.0
        %1998 = vmatpush.msra.mxu0 0.0
        %1999 = vmatpush.msra.mxu0 0.0
        %2000 = vmatpush.msra.mxu0 %v1895
        %2001 = vmatpush.msra.mxu0 %v1840
        %2002 = vmatpush.msra.mxu0 %v1832
        %2003 = vmatmul.f32.gmra.mxu0 %v1877
        %v2004 = vpop.f32.mrf.mxu0
        %v2005 = vadd.f32 %v1864, %v2004
        %2006 = vmatmul.f32.gmra.mxu0 %v1880
        %v2007 = vpop.f32.mrf.mxu0
        %v2008 = vadd.f32 %v1869, %v2007
        %2009 = vmatmul.f32.gmra.mxu0 %v1883
        %v2010 = vpop.f32.mrf.mxu0
        %v2011 = vadd.f32 %v1874, %v2010
        %2012 = vdwg.mxu0
        %2013 = vmatpush.msra.mxu0 0.0
        %2014 = vmatpush.msra.mxu0 0.0
        %2015 = vmatpush.msra.mxu0 0.0
        %2016 = vmatpush.msra.mxu0 0.0
        %2017 = vmatpush.msra.mxu0 0.0
        %2018 = vmatpush.msra.mxu0 0.0
        %2019 = vmatpush.msra.mxu0 0.0
        %2020 = vmatpush.msra.mxu0 0.0
        %2021 = vmatpush.msra.mxu0 0.0
        %2022 = vmatpush.msra.mxu0 0.0
        %2023 = vmatpush.msra.mxu0 0.0
        %2024 = vmatpush.msra.mxu0 0.0
        %2025 = vmatpush.msra.mxu0 0.0
        %2026 = vmatpush.msra.mxu0 %v1898
        %2027 = vmatpush.msra.mxu0 %v1841
        %2028 = vmatpush.msra.mxu0 %v1833
        %2029 = vmatmul.f32.gmra.mxu0 %v1877
        %v2030 = vpop.f32.mrf.mxu0
        %v2031 = vadd.f32 %v1864, %v2030
        %2032 = vmatmul.f32.gmra.mxu0 %v1880
        %v2033 = vpop.f32.mrf.mxu0
        %v2034 = vadd.f32 %v1869, %v2033
        %2035 = vmatmul.f32.gmra.mxu0 %v1883
        %v2036 = vpop.f32.mrf.mxu0
        %v2037 = vadd.f32 %v1874, %v2036
        %2038 = vdwg.mxu0
        %2039 = vmatpush.msra.mxu0 0.0
        %2040 = vmatpush.msra.mxu0 0.0
        %2041 = vmatpush.msra.mxu0 0.0
        %2042 = vmatpush.msra.mxu0 0.0
        %2043 = vmatpush.msra.mxu0 0.0
        %2044 = vmatpush.msra.mxu0 0.0
        %2045 = vmatpush.msra.mxu0 0.0
        %2046 = vmatpush.msra.mxu0 0.0
        %2047 = vmatpush.msra.mxu0 0.0
        %2048 = vmatpush.msra.mxu0 0.0
        %2049 = vmatpush.msra.mxu0 0.0
        %2050 = vmatpush.msra.mxu0 0.0
        %2051 = vmatpush.msra.mxu0 0.0
        %2052 = vmatpush.msra.mxu0 %v1901
        %2053 = vmatpush.msra.mxu0 %v1842
        %2054 = vmatpush.msra.mxu0 %v1834
        %2055 = vmatmul.f32.gmra.mxu0 %v1877
        %v2056 = vpop.f32.mrf.mxu0
        %v2057 = vadd.f32 %v1864, %v2056
        %2058 = vmatmul.f32.gmra.mxu0 %v1880
        %v2059 = vpop.f32.mrf.mxu0
        %v2060 = vadd.f32 %v1869, %v2059
        %2061 = vmatmul.f32.gmra.mxu0 %v1883
        %v2062 = vpop.f32.mrf.mxu0
        %v2063 = vadd.f32 %v1874, %v2062
        %2064 = vdwg.mxu0
        %2065 = vmatpush.msra.mxu0 0.0
        %2066 = vmatpush.msra.mxu0 0.0
        %2067 = vmatpush.msra.mxu0 0.0
        %2068 = vmatpush.msra.mxu0 0.0
        %2069 = vmatpush.msra.mxu0 0.0
        %2070 = vmatpush.msra.mxu0 0.0
        %2071 = vmatpush.msra.mxu0 0.0
        %2072 = vmatpush.msra.mxu0 0.0
        %2073 = vmatpush.msra.mxu0 0.0
        %2074 = vmatpush.msra.mxu0 0.0
        %2075 = vmatpush.msra.mxu0 0.0
        %2076 = vmatpush.msra.mxu0 0.0
        %2077 = vmatpush.msra.mxu0 0.0
        %2078 = vmatpush.msra.mxu0 %v1904
        %2079 = vmatpush.msra.mxu0 %v1843
        %2080 = vmatpush.msra.mxu0 %v1835
        %2081 = vmatmul.f32.gmra.mxu0 %v1877
        %v2082 = vpop.f32.mrf.mxu0
        %v2083 = vadd.f32 %v1864, %v2082
        %2084 = vmatmul.f32.gmra.mxu0 %v1880
        %v2085 = vpop.f32.mrf.mxu0
        %v2086 = vadd.f32 %v1869, %v2085
        %2087 = vmatmul.f32.gmra.mxu0 %v1883
        %v2088 = vpop.f32.mrf.mxu0
        %v2089 = vadd.f32 %v1874, %v2088
        %2090 = vdwg.mxu0
        %2091 = vmatpush.msra.mxu0 0.0
        %2092 = vmatpush.msra.mxu0 0.0
        %2093 = vmatpush.msra.mxu0 0.0
        %2094 = vmatpush.msra.mxu0 0.0
        %2095 = vmatpush.msra.mxu0 0.0
        %2096 = vmatpush.msra.mxu0 0.0
        %2097 = vmatpush.msra.mxu0 0.0
        %2098 = vmatpush.msra.mxu0 0.0
        %2099 = vmatpush.msra.mxu0 0.0
        %2100 = vmatpush.msra.mxu0 0.0
        %2101 = vmatpush.msra.mxu0 0.0
        %2102 = vmatpush.msra.mxu0 0.0
        %2103 = vmatpush.msra.mxu0 0.0
        %2104 = vmatpush.msra.mxu0 %v1907
        %2105 = vmatpush.msra.mxu0 %v1844
        %2106 = vmatpush.msra.mxu0 %v1836
        %2107 = vmatmul.f32.gmra.mxu0 %v1877
        %v2108 = vpop.f32.mrf.mxu0
        %v2109 = vadd.f32 %v1864, %v2108
        %2110 = vmatmul.f32.gmra.mxu0 %v1880
        %v2111 = vpop.f32.mrf.mxu0
        %v2112 = vadd.f32 %v1869, %v2111
        %2113 = vmatmul.f32.gmra.mxu0 %v1883
        %v2114 = vpop.f32.mrf.mxu0
        %v2115 = vadd.f32 %v1874, %v2114
        %2116 = vdwg.mxu0
        %v2117 = vtanh.pop %v1927
        %v2118 = vtanh.pop %v1953
        %v2119 = vtanh.pop %v1979
        %v2120 = vtanh.pop %v2005
        %v2121 = vtanh.pop %v2031
        %v2122 = vtanh.pop %v2057
        %v2123 = vtanh.pop %v2083
        %v2124 = vtanh.pop %v2109
        %v2125 = vtanh.pop %v1930
        %v2126 = vtanh.pop %v1956
        %v2127 = vtanh.pop %v1982
        %v2128 = vtanh.pop %v2008
        %v2129 = vtanh.pop %v2034
        %v2130 = vtanh.pop %v2060
        %v2131 = vtanh.pop %v2086
        %v2132 = vtanh.pop %v2112
        %v2133 = vtanh.pop %v1933
        %v2134 = vtanh.pop %v1959
        %v2135 = vtanh.pop %v1985
        %v2136 = vtanh.pop %v2011
        %v2137 = vtanh.pop %v2037
        %v2138 = vtanh.pop %v2063
        %v2139 = vtanh.pop %v2089
        %v2140 = vtanh.pop %v2115
        %s2141 = scalar_lea.vmem %s1, 168
        %v2142 = vld [vmem:[%s2141] sm:$0xff]
        %v2143 = vld [vmem:[%s2141 + $0x8] sm:$0xff]
        %v2144 = vld [vmem:[%s2141 + $0x10] sm:$0xf]
        %s2145 = scalar_lea.vmem %s2, 168
        %v2146 = vld [vmem:[%s2145] sm:$0xff]
        %v2147 = vld [vmem:[%s2145 + $0x8] sm:$0xff]
        %v2148 = vld [vmem:[%s2145 + $0x10] sm:$0xf]
        %2150 = vset.pattern.permute.xlu0 0
        %2151 = vperm.xlu0 %2150, %v2146
        %v2152 = vpop.permute.xlu0 %2151
        %2155 = vset.pattern.permute.xlu0 0
        %2156 = vperm.xlu0 %2155, %v2147
        %v2157 = vpop.permute.xlu0 %2156
        %2160 = vset.pattern.permute.xlu0 0
        %2161 = vperm.xlu0 %2160, %v2148
        %v2162 = vpop.permute.xlu0 %2161
        %v2165 = vsel %vm434, %v2142, 0
        %v2168 = vsel %vm434, %v2143, 0
        %v2171 = vsel %vm434, %v2144, 0
        %v2174 = vsel %vm444, %v2133, 0
        %v2177 = vsel %vm444, %v2134, 0
        %v2180 = vsel %vm444, %v2135, 0
        %v2183 = vsel %vm444, %v2136, 0
        %v2186 = vsel %vm444, %v2137, 0
        %v2189 = vsel %vm444, %v2138, 0
        %v2192 = vsel %vm444, %v2139, 0
        %v2195 = vsel %vm444, %v2140, 0
        %2197 = vmatpush.msra.mxu0 0.0
        %2198 = vmatpush.msra.mxu0 0.0
        %2199 = vmatpush.msra.mxu0 0.0
        %2200 = vmatpush.msra.mxu0 0.0
        %2201 = vmatpush.msra.mxu0 0.0
        %2202 = vmatpush.msra.mxu0 0.0
        %2203 = vmatpush.msra.mxu0 0.0
        %2204 = vmatpush.msra.mxu0 0.0
        %2205 = vmatpush.msra.mxu0 0.0
        %2206 = vmatpush.msra.mxu0 0.0
        %2207 = vmatpush.msra.mxu0 0.0
        %2208 = vmatpush.msra.mxu0 0.0
        %2209 = vmatpush.msra.mxu0 0.0
        %2210 = vmatpush.msra.mxu0 %v2174
        %2211 = vmatpush.msra.mxu0 %v2125
        %2212 = vmatpush.msra.mxu0 %v2117
        %2213 = vmatmul.f32.gmra.mxu0 %v2165
        %v2214 = vpop.f32.mrf.mxu0
        %v2215 = vadd.f32 %v2152, %v2214
        %2216 = vmatmul.f32.gmra.mxu0 %v2168
        %v2217 = vpop.f32.mrf.mxu0
        %v2218 = vadd.f32 %v2157, %v2217
        %2219 = vmatmul.f32.gmra.mxu0 %v2171
        %v2220 = vpop.f32.mrf.mxu0
        %v2221 = vadd.f32 %v2162, %v2220
        %2222 = vdwg.mxu0
        %2223 = vmatpush.msra.mxu0 0.0
        %2224 = vmatpush.msra.mxu0 0.0
        %2225 = vmatpush.msra.mxu0 0.0
        %2226 = vmatpush.msra.mxu0 0.0
        %2227 = vmatpush.msra.mxu0 0.0
        %2228 = vmatpush.msra.mxu0 0.0
        %2229 = vmatpush.msra.mxu0 0.0
        %2230 = vmatpush.msra.mxu0 0.0
        %2231 = vmatpush.msra.mxu0 0.0
        %2232 = vmatpush.msra.mxu0 0.0
        %2233 = vmatpush.msra.mxu0 0.0
        %2234 = vmatpush.msra.mxu0 0.0
        %2235 = vmatpush.msra.mxu0 0.0
        %2236 = vmatpush.msra.mxu0 %v2177
        %2237 = vmatpush.msra.mxu0 %v2126
        %2238 = vmatpush.msra.mxu0 %v2118
        %2239 = vmatmul.f32.gmra.mxu0 %v2165
        %v2240 = vpop.f32.mrf.mxu0
        %v2241 = vadd.f32 %v2152, %v2240
        %2242 = vmatmul.f32.gmra.mxu0 %v2168
        %v2243 = vpop.f32.mrf.mxu0
        %v2244 = vadd.f32 %v2157, %v2243
        %2245 = vmatmul.f32.gmra.mxu0 %v2171
        %v2246 = vpop.f32.mrf.mxu0
        %v2247 = vadd.f32 %v2162, %v2246
        %2248 = vdwg.mxu0
        %2249 = vmatpush.msra.mxu0 0.0
        %2250 = vmatpush.msra.mxu0 0.0
        %2251 = vmatpush.msra.mxu0 0.0
        %2252 = vmatpush.msra.mxu0 0.0
        %2253 = vmatpush.msra.mxu0 0.0
        %2254 = vmatpush.msra.mxu0 0.0
        %2255 = vmatpush.msra.mxu0 0.0
        %2256 = vmatpush.msra.mxu0 0.0
        %2257 = vmatpush.msra.mxu0 0.0
        %2258 = vmatpush.msra.mxu0 0.0
        %2259 = vmatpush.msra.mxu0 0.0
        %2260 = vmatpush.msra.mxu0 0.0
        %2261 = vmatpush.msra.mxu0 0.0
        %2262 = vmatpush.msra.mxu0 %v2180
        %2263 = vmatpush.msra.mxu0 %v2127
        %2264 = vmatpush.msra.mxu0 %v2119
        %2265 = vmatmul.f32.gmra.mxu0 %v2165
        %v2266 = vpop.f32.mrf.mxu0
        %v2267 = vadd.f32 %v2152, %v2266
        %2268 = vmatmul.f32.gmra.mxu0 %v2168
        %v2269 = vpop.f32.mrf.mxu0
        %v2270 = vadd.f32 %v2157, %v2269
        %2271 = vmatmul.f32.gmra.mxu0 %v2171
        %v2272 = vpop.f32.mrf.mxu0
        %v2273 = vadd.f32 %v2162, %v2272
        %2274 = vdwg.mxu0
        %2275 = vmatpush.msra.mxu0 0.0
        %2276 = vmatpush.msra.mxu0 0.0
        %2277 = vmatpush.msra.mxu0 0.0
        %2278 = vmatpush.msra.mxu0 0.0
        %2279 = vmatpush.msra.mxu0 0.0
        %2280 = vmatpush.msra.mxu0 0.0
        %2281 = vmatpush.msra.mxu0 0.0
        %2282 = vmatpush.msra.mxu0 0.0
        %2283 = vmatpush.msra.mxu0 0.0
        %2284 = vmatpush.msra.mxu0 0.0
        %2285 = vmatpush.msra.mxu0 0.0
        %2286 = vmatpush.msra.mxu0 0.0
        %2287 = vmatpush.msra.mxu0 0.0
        %2288 = vmatpush.msra.mxu0 %v2183
        %2289 = vmatpush.msra.mxu0 %v2128
        %2290 = vmatpush.msra.mxu0 %v2120
        %2291 = vmatmul.f32.gmra.mxu0 %v2165
        %v2292 = vpop.f32.mrf.mxu0
        %v2293 = vadd.f32 %v2152, %v2292
        %2294 = vmatmul.f32.gmra.mxu0 %v2168
        %v2295 = vpop.f32.mrf.mxu0
        %v2296 = vadd.f32 %v2157, %v2295
        %2297 = vmatmul.f32.gmra.mxu0 %v2171
        %v2298 = vpop.f32.mrf.mxu0
        %v2299 = vadd.f32 %v2162, %v2298
        %2300 = vdwg.mxu0
        %2301 = vmatpush.msra.mxu0 0.0
        %2302 = vmatpush.msra.mxu0 0.0
        %2303 = vmatpush.msra.mxu0 0.0
        %2304 = vmatpush.msra.mxu0 0.0
        %2305 = vmatpush.msra.mxu0 0.0
        %2306 = vmatpush.msra.mxu0 0.0
        %2307 = vmatpush.msra.mxu0 0.0
        %2308 = vmatpush.msra.mxu0 0.0
        %2309 = vmatpush.msra.mxu0 0.0
        %2310 = vmatpush.msra.mxu0 0.0
        %2311 = vmatpush.msra.mxu0 0.0
        %2312 = vmatpush.msra.mxu0 0.0
        %2313 = vmatpush.msra.mxu0 0.0
        %2314 = vmatpush.msra.mxu0 %v2186
        %2315 = vmatpush.msra.mxu0 %v2129
        %2316 = vmatpush.msra.mxu0 %v2121
        %2317 = vmatmul.f32.gmra.mxu0 %v2165
        %v2318 = vpop.f32.mrf.mxu0
        %v2319 = vadd.f32 %v2152, %v2318
        %2320 = vmatmul.f32.gmra.mxu0 %v2168
        %v2321 = vpop.f32.mrf.mxu0
        %v2322 = vadd.f32 %v2157, %v2321
        %2323 = vmatmul.f32.gmra.mxu0 %v2171
        %v2324 = vpop.f32.mrf.mxu0
        %v2325 = vadd.f32 %v2162, %v2324
        %2326 = vdwg.mxu0
        %2327 = vmatpush.msra.mxu0 0.0
        %2328 = vmatpush.msra.mxu0 0.0
        %2329 = vmatpush.msra.mxu0 0.0
        %2330 = vmatpush.msra.mxu0 0.0
        %2331 = vmatpush.msra.mxu0 0.0
        %2332 = vmatpush.msra.mxu0 0.0
        %2333 = vmatpush.msra.mxu0 0.0
        %2334 = vmatpush.msra.mxu0 0.0
        %2335 = vmatpush.msra.mxu0 0.0
        %2336 = vmatpush.msra.mxu0 0.0
        %2337 = vmatpush.msra.mxu0 0.0
        %2338 = vmatpush.msra.mxu0 0.0
        %2339 = vmatpush.msra.mxu0 0.0
        %2340 = vmatpush.msra.mxu0 %v2189
        %2341 = vmatpush.msra.mxu0 %v2130
        %2342 = vmatpush.msra.mxu0 %v2122
        %2343 = vmatmul.f32.gmra.mxu0 %v2165
        %v2344 = vpop.f32.mrf.mxu0
        %v2345 = vadd.f32 %v2152, %v2344
        %2346 = vmatmul.f32.gmra.mxu0 %v2168
        %v2347 = vpop.f32.mrf.mxu0
        %v2348 = vadd.f32 %v2157, %v2347
        %2349 = vmatmul.f32.gmra.mxu0 %v2171
        %v2350 = vpop.f32.mrf.mxu0
        %v2351 = vadd.f32 %v2162, %v2350
        %2352 = vdwg.mxu0
        %2353 = vmatpush.msra.mxu0 0.0
        %2354 = vmatpush.msra.mxu0 0.0
        %2355 = vmatpush.msra.mxu0 0.0
        %2356 = vmatpush.msra.mxu0 0.0
        %2357 = vmatpush.msra.mxu0 0.0
        %2358 = vmatpush.msra.mxu0 0.0
        %2359 = vmatpush.msra.mxu0 0.0
        %2360 = vmatpush.msra.mxu0 0.0
        %2361 = vmatpush.msra.mxu0 0.0
        %2362 = vmatpush.msra.mxu0 0.0
        %2363 = vmatpush.msra.mxu0 0.0
        %2364 = vmatpush.msra.mxu0 0.0
        %2365 = vmatpush.msra.mxu0 0.0
        %2366 = vmatpush.msra.mxu0 %v2192
        %2367 = vmatpush.msra.mxu0 %v2131
        %2368 = vmatpush.msra.mxu0 %v2123
        %2369 = vmatmul.f32.gmra.mxu0 %v2165
        %v2370 = vpop.f32.mrf.mxu0
        %v2371 = vadd.f32 %v2152, %v2370
        %2372 = vmatmul.f32.gmra.mxu0 %v2168
        %v2373 = vpop.f32.mrf.mxu0
        %v2374 = vadd.f32 %v2157, %v2373
        %2375 = vmatmul.f32.gmra.mxu0 %v2171
        %v2376 = vpop.f32.mrf.mxu0
        %v2377 = vadd.f32 %v2162, %v2376
        %2378 = vdwg.mxu0
        %2379 = vmatpush.msra.mxu0 0.0
        %2380 = vmatpush.msra.mxu0 0.0
        %2381 = vmatpush.msra.mxu0 0.0
        %2382 = vmatpush.msra.mxu0 0.0
        %2383 = vmatpush.msra.mxu0 0.0
        %2384 = vmatpush.msra.mxu0 0.0
        %2385 = vmatpush.msra.mxu0 0.0
        %2386 = vmatpush.msra.mxu0 0.0
        %2387 = vmatpush.msra.mxu0 0.0
        %2388 = vmatpush.msra.mxu0 0.0
        %2389 = vmatpush.msra.mxu0 0.0
        %2390 = vmatpush.msra.mxu0 0.0
        %2391 = vmatpush.msra.mxu0 0.0
        %2392 = vmatpush.msra.mxu0 %v2195
        %2393 = vmatpush.msra.mxu0 %v2132
        %2394 = vmatpush.msra.mxu0 %v2124
        %2395 = vmatmul.f32.gmra.mxu0 %v2165
        %v2396 = vpop.f32.mrf.mxu0
        %v2397 = vadd.f32 %v2152, %v2396
        %2398 = vmatmul.f32.gmra.mxu0 %v2168
        %v2399 = vpop.f32.mrf.mxu0
        %v2400 = vadd.f32 %v2157, %v2399
        %2401 = vmatmul.f32.gmra.mxu0 %v2171
        %v2402 = vpop.f32.mrf.mxu0
        %v2403 = vadd.f32 %v2162, %v2402
        %2404 = vdwg.mxu0
        %v2405 = vtanh.pop %v2215
        %v2406 = vtanh.pop %v2241
        %v2407 = vtanh.pop %v2267
        %v2408 = vtanh.pop %v2293
        %v2409 = vtanh.pop %v2319
        %v2410 = vtanh.pop %v2345
        %v2411 = vtanh.pop %v2371
        %v2412 = vtanh.pop %v2397
        %v2413 = vtanh.pop %v2218
        %v2414 = vtanh.pop %v2244
        %v2415 = vtanh.pop %v2270
        %v2416 = vtanh.pop %v2296
        %v2417 = vtanh.pop %v2322
        %v2418 = vtanh.pop %v2348
        %v2419 = vtanh.pop %v2374
        %v2420 = vtanh.pop %v2400
        %v2421 = vtanh.pop %v2221
        %v2422 = vtanh.pop %v2247
        %v2423 = vtanh.pop %v2273
        %v2424 = vtanh.pop %v2299
        %v2425 = vtanh.pop %v2325
        %v2426 = vtanh.pop %v2351
        %v2427 = vtanh.pop %v2377
        %v2428 = vtanh.pop %v2403
        %s2429 = scalar_lea.vmem %s1, 192
        %v2430 = vld [vmem:[%s2429] sm:$0xff]
        %v2431 = vld [vmem:[%s2429 + $0x8] sm:$0xff]
        %v2432 = vld [vmem:[%s2429 + $0x10] sm:$0xf]
        %s2433 = scalar_lea.vmem %s2, 192
        %v2434 = vld [vmem:[%s2433] sm:$0xff]
        %2436 = vset.pattern.permute.xlu0 0
        %2437 = vperm.xlu0 %2436, %v2430
        %v2438 = vpop.permute.xlu0 %2437
        %2441 = vset.pattern.permute.xlu0 0
        %2442 = vperm.xlu0 %2441, %v2431
        %v2443 = vpop.permute.xlu0 %2442
        %2446 = vset.pattern.permute.xlu0 0
        %2447 = vperm.xlu0 %2446, %v2432
        %v2448 = vpop.permute.xlu0 %2447
        %v2450 = vmul.f32 %v2438, %v2405
        %v2451 = vmul.f32 %v2438, %v2406
        %v2452 = vmul.f32 %v2438, %v2407
        %v2453 = vmul.f32 %v2438, %v2408
        %v2454 = vmul.f32 %v2438, %v2409
        %v2455 = vmul.f32 %v2438, %v2410
        %v2456 = vmul.f32 %v2438, %v2411
        %v2457 = vmul.f32 %v2438, %v2412
        %v2458 = vmul.f32 %v2443, %v2413
        %v2459 = vmul.f32 %v2443, %v2414
        %v2460 = vmul.f32 %v2443, %v2415
        %v2461 = vmul.f32 %v2443, %v2416
        %v2462 = vmul.f32 %v2443, %v2417
        %v2463 = vmul.f32 %v2443, %v2418
        %v2464 = vmul.f32 %v2443, %v2419
        %v2465 = vmul.f32 %v2443, %v2420
        %v2466 = vmul.f32 %v2448, %v2421
        %v2467 = vmul.f32 %v2448, %v2422
        %v2468 = vmul.f32 %v2448, %v2423
        %v2469 = vmul.f32 %v2448, %v2424
        %v2470 = vmul.f32 %v2448, %v2425
        %v2471 = vmul.f32 %v2448, %v2426
        %v2472 = vmul.f32 %v2448, %v2427
        %v2473 = vmul.f32 %v2448, %v2428
        %v2474 = vadd.f32 %v2450, %v2458
        %v2475 = vsel %vm444, %v2466, 0.0
        %v2476 = vadd.f32 %v2474, %v2475
        %v2477 = vrot.slane %v2476, 4
        %v2478 = vadd.f32 %v2476, %v2477
        %v2479 = vrot.slane %v2478, 2
        %v2480 = vadd.f32 %v2478, %v2479
        %v2481 = vrot.slane %v2480, 1
        %v2482 = vadd.f32 %v2480, %v2481
        %v2483 = vadd.f32 %v2451, %v2459
        %v2484 = vsel %vm444, %v2467, 0.0
        %v2485 = vadd.f32 %v2483, %v2484
        %v2486 = vrot.slane %v2485, 4
        %v2487 = vadd.f32 %v2485, %v2486
        %v2488 = vrot.slane %v2487, 2
        %v2489 = vadd.f32 %v2487, %v2488
        %v2490 = vrot.slane %v2489, 1
        %v2491 = vadd.f32 %v2489, %v2490
        %v2492 = vadd.f32 %v2452, %v2460
        %v2493 = vsel %vm444, %v2468, 0.0
        %v2494 = vadd.f32 %v2492, %v2493
        %v2495 = vrot.slane %v2494, 4
        %v2496 = vadd.f32 %v2494, %v2495
        %v2497 = vrot.slane %v2496, 2
        %v2498 = vadd.f32 %v2496, %v2497
        %v2499 = vrot.slane %v2498, 1
        %v2500 = vadd.f32 %v2498, %v2499
        %v2501 = vadd.f32 %v2453, %v2461
        %v2502 = vsel %vm444, %v2469, 0.0
        %v2503 = vadd.f32 %v2501, %v2502
        %v2504 = vrot.slane %v2503, 4
        %v2505 = vadd.f32 %v2503, %v2504
        %v2506 = vrot.slane %v2505, 2
        %v2507 = vadd.f32 %v2505, %v2506
        %v2508 = vrot.slane %v2507, 1
        %v2509 = vadd.f32 %v2507, %v2508
        %v2510 = vadd.f32 %v2454, %v2462
        %v2511 = vsel %vm444, %v2470, 0.0
        %v2512 = vadd.f32 %v2510, %v2511
        %v2513 = vrot.slane %v2512, 4
        %v2514 = vadd.f32 %v2512, %v2513
        %v2515 = vrot.slane %v2514, 2
        %v2516 = vadd.f32 %v2514, %v2515
        %v2517 = vrot.slane %v2516, 1
        %v2518 = vadd.f32 %v2516, %v2517
        %v2519 = vadd.f32 %v2455, %v2463
        %v2520 = vsel %vm444, %v2471, 0.0
        %v2521 = vadd.f32 %v2519, %v2520
        %v2522 = vrot.slane %v2521, 4
        %v2523 = vadd.f32 %v2521, %v2522
        %v2524 = vrot.slane %v2523, 2
        %v2525 = vadd.f32 %v2523, %v2524
        %v2526 = vrot.slane %v2525, 1
        %v2527 = vadd.f32 %v2525, %v2526
        %v2528 = vadd.f32 %v2456, %v2464
        %v2529 = vsel %vm444, %v2472, 0.0
        %v2530 = vadd.f32 %v2528, %v2529
        %v2531 = vrot.slane %v2530, 4
        %v2532 = vadd.f32 %v2530, %v2531
        %v2533 = vrot.slane %v2532, 2
        %v2534 = vadd.f32 %v2532, %v2533
        %v2535 = vrot.slane %v2534, 1
        %v2536 = vadd.f32 %v2534, %v2535
        %v2537 = vadd.f32 %v2457, %v2465
        %v2538 = vsel %vm444, %v2473, 0.0
        %v2539 = vadd.f32 %v2537, %v2538
        %v2540 = vrot.slane %v2539, 4
        %v2541 = vadd.f32 %v2539, %v2540
        %v2542 = vrot.slane %v2541, 2
        %v2543 = vadd.f32 %v2541, %v2542
        %v2544 = vrot.slane %v2543, 1
        %v2545 = vadd.f32 %v2543, %v2544
        %2547 = vset.pattern.permute.xlu0 0
        %2548 = vperm.xlu0 %2547, %v2434
        %v2549 = vpop.permute.xlu0 %2548
        %v2551 = vadd.f32 %v2482, %v2549
        %v2552 = vadd.f32 %v2491, %v2549
        %v2553 = vadd.f32 %v2500, %v2549
        %v2554 = vadd.f32 %v2509, %v2549
        %v2555 = vadd.f32 %v2518, %v2549
        %v2556 = vadd.f32 %v2527, %v2549
        %v2557 = vadd.f32 %v2536, %v2549
        %v2558 = vadd.f32 %v2545, %v2549
        %v2567 = vrot.slane %v2552, 7
        %v2568 = vrot.slane %v2553, 6
        %v2569 = vrot.slane %v2554, 5
        %v2570 = vrot.slane %v2555, 4
        %v2571 = vrot.slane %v2556, 3
        %v2572 = vrot.slane %v2557, 2
        %v2573 = vrot.slane %v2558, 1
        %vm2574 = vcmask 1040384
        %v2575 = vsel %vm2574, %v2551, %v2567
        %vm2576 = vcmask 1042434
        %v2577 = vsel %vm2576, %v2568, %v2569
        %vm2578 = vcmask 1041408
        %v2579 = vsel %vm2578, %v2575, %v2577
        %vm2580 = vcmask 1044484
        %v2581 = vsel %vm2580, %v2570, %v2571
        %vm2582 = vcmask 1046534
        %v2583 = vsel %vm2582, %v2572, %v2573
        %vm2584 = vcmask 1045508
        %v2585 = vsel %vm2584, %v2581, %v2583
        %v2586 = vsel %vm444, %v2579, %v2585
        %2588 = vst [vmem:[%s188] sm:$0xff] %v2586
        %s2589 = sand.u32 %s96, 1
        %s2590 = scalar_lea.sflag [#allocation4], %s2589
        %s2591 = sand.u32 %s96, 1
        %s2592 = smul.addr %s2591, 8
        %s2593 = scalar_lea.vmem [#allocation5], %s2592
        // Predicated region
        $region37: #{tpu_custom_call.1} parent=31 // pred_check
          %p2594 = pneg %p106
        $region38: #{tpu_custom_call.1} parent=31 // pred_check_branch
          %2596 = sbr.rel (%p2594) target = $region40
        $region39: #{tpu_custom_call.1} parent=31 // pred_region
          %s2597 = smul.u32 8, %s20
          %2599 = vsyncadd %s2590, 0
          %s2600 = scalar_lea.hbm %s3, %s2597
          %s2602 = sshll.u32 %s2593, 4
          %s2603 = int_to_ptr.vmem [resolvable:$true] %s2602
          %s2604 = sshll.u32 %s2600, 4
          %s2605 = int_to_ptr.hbm [resolvable:$true] %s2604
          %2607 = dma.vmem_to_hbm [thread:$0]  %s2603, 128, %s2605, %s2590
        $region40: #{tpu_custom_call.1} parent=31 // pred_fallthru
          _
      $region32: #{tpu_custom_call.1} parent=5 // pred_fallthru
        _
      %p2608 = scmp.le.s32.totalorder 2, %s15
      // Predicated region
      $region41: #{tpu_custom_call.1} parent=5 // pred_check
        %p2609 = pneg %p2608
      $region42: #{tpu_custom_call.1} parent=5 // pred_check_branch
        %2611 = sbr.rel (%p2609) target = $region44
      $region43: #{tpu_custom_call.1} parent=5 // pred_region
        %s2612 = ssub.s32 %s15, 2
        // Predicated region
        $region45: #{tpu_custom_call.1} parent=43 // pred_check
          %p2613 = pneg %p112
        $region46: #{tpu_custom_call.1} parent=43 // pred_check_branch
          %2615 = sbr.rel (%p2613) target = $region48
        $region47: #{tpu_custom_call.1} parent=43 // pred_region
          %s2616 = sand.u32 %s97, 1
          %s2617 = scalar_lea.sflag [#allocation4], %s2616
          %s2618 = sand.u32 %s97, 1
          %s2619 = smul.addr %s2618, 8
          %s2620 = scalar_lea.vmem [#allocation5], %s2619
          %2622 = dma.done %s2617, 128
        $region48: #{tpu_custom_call.1} parent=43 // pred_fallthru
          _
      $region44: #{tpu_custom_call.1} parent=5 // pred_fallthru
        _
    $region6: #{tpu_custom_call.1} parent=1 // loop_footer
      %s19 = sadd.s32 1, %s15
    $region7: #{tpu_custom_call.1} parent=1 // loop_footer_branch
      %14 = sbr.rel target = $region3
    $region8: #{tpu_custom_call.1} parent=1 // loop_exit
      _
    %2623 = vsyncpa [#allocation3], 1
    %s2624 = scalar_lea.sflag [#allocation3], 1
    %2625 = vsyncpa %s2624, 1
    %2626 = vsyncpa [#allocation4], 1
    %s2627 = scalar_lea.sflag [#allocation4], 1
    %2628 = vsyncpa %s2627, 1

</llo_original>
